<compile_context>
chip_gen: v7x
topology: tpu7x:2x2x1
jax: 0.10.0
libtpu: 0.0.40
codegen_flags: <defaults>
</compile_context>

<pallas_src>
import jax
import jax.numpy as jnp
import numpy as np
from jax.experimental import pallas as pl
from jax.experimental.pallas import tpu as pltpu

EPS = 1e-5  # torch.nn.InstanceNorm2d default (affine=False, biased variance)

_TAPS = tuple((dy, dx) for dy in (-1, 0, 1) for dx in (-1, 0, 1))  # t = ky*3+kx


def _make_resblock_kernel(H, W, HW, C, Cp, base):
    """Builds the fused residual-block kernel for a fixed spatial size."""

    def conv_instnorm(pbuf, stack_ref, w_ref, masks):
        """Reflect-padded 3x3 conv as ONE deep-K MXU matmul + one-pass inst-norm.

        pbuf[:, base:base+HW] holds the (Cp, H*W) activation.  For each of the
        9 taps the shifted window is read from the line buffer, boundary
        reflection is fixed with (1, HW) mask selects (so no padded copy of the
        activation ever hits HBM), and the window is stored into its Cp-row
        slot of the (9*Cp, HW) stack buffer.  A single (Cp, 9*Cp) x (9*Cp, HW)
        dot then produces the conv output with K = 9*Cp.
        """
        top, bottom, left, right, corner = masks
        for t, (dy, dx) in enumerate(_TAPS):
            off = base + dy * W + dx
            win = pbuf[:, off:off + HW]
            if dx != 0:                                       # reflect in w
                mw = left if dx < 0 else right
                ow = off - 2 * dx
                win = jnp.where(mw, pbuf[:, ow:ow + HW], win)
            if dy != 0:                                       # reflect in h
                mh = top if dy < 0 else bottom
                oh = off - 2 * dy * W
                win = jnp.where(mh, pbuf[:, oh:oh + HW], win)
            if dy != 0 and dx != 0:                           # corners
                oc = base - dy * W - dx
                win = jnp.where(corner[(dy, dx)], pbuf[:, oc:oc + HW], win)
            stack_ref[t * Cp:(t + 1) * Cp, :] = win.astype(stack_ref.dtype)
        # One MXU matmul over the full contraction (f32 accumulation).
        acc = jnp.dot(w_ref[...], stack_ref[...],
                      preferred_element_type=jnp.float32)
        # One-pass instance norm (biased variance, eps inside rsqrt), f32 stats.
        mean = jnp.sum(acc, axis=1, keepdims=True) * (1.0 / HW)
        mean_sq = jnp.sum(acc * acc, axis=1, keepdims=True) * (1.0 / HW)
        var = mean_sq - mean * mean
        return (acc - mean) * jax.lax.rsqrt(var + EPS)

    def kernel(x_ref, w1_ref, w2_ref, out_ref, pbuf, stack_ref):
        # Boundary masks built once at (1, HW); channel-invariant, broadcast in
        # the selects.  top/bottom need no div/mod at all; one rem for columns.
        flat = jax.lax.broadcasted_iota(jnp.int32, (1, HW), 1)
        col = jax.lax.rem(flat, jnp.int32(W))
        top, bottom = flat < W, flat >= HW - W
        left, right = col == 0, col == W - 1
        corner = {(-1, -1): top & left, (-1, 1): top & right,
                  (1, -1): bottom & left, (1, 1): bottom & right}
        masks = (top, bottom, left, right, corner)

        # Zero the halo strips once per sample (hygiene: the halo lanes are
        # always overwritten by the boundary selects, but never read stale
        # scratch VMEM).
        pbuf[:, :base] = jnp.zeros((Cp, base), jnp.float32)
        pbuf[:, base + HW:] = jnp.zeros((Cp, base), jnp.float32)

        # Stage 1: reflect-pad -> conv1 -> instance norm -> ReLU.
        pbuf[:, base:base + HW] = x_ref[...]
        h = jnp.maximum(conv_instnorm(pbuf, stack_ref, w1_ref, masks), 0.0)
        # Stage 2: reflect-pad -> conv2 -> instance norm -> residual add.
        pbuf[:, base:base + HW] = h
        y = conv_instnorm(pbuf, stack_ref, w2_ref, masks)
        # Residual add; only the C real channels are written back to HBM.
        out_ref[...] = (x_ref[...] + y)[:C, :]

    return kernel


def residual_block(x, w1, b1, w2, b2, *, matmul_dtype=jnp.float32):
    """x: (N, C, H, W) f32; w*: (C, C, 3, 3); b*: (C,). Returns (N, C, H, W).

    b1/b2 are accepted for API parity with the PyTorch module but are unused:
    InstanceNorm2d(affine=False) subtracts the per-channel spatial mean, so a
    bias added before the norm cancels exactly.  On v6e/v7x, pass
    matmul_dtype=jnp.bfloat16 to run the MXU at full rate (stats stay in f32).
    """
    del b1, b2  # mathematically cancelled by the following InstanceNorm
    N, C, H, W = x.shape
    HW = H * W
    Cp = -(-C // 8) * 8                  # channels padded to a sublane multiple
    base = -(-(W + 1) // 128) * 128      # lane-aligned halo for +/-(W+1) reads
    buf_w = base + HW + base

    # ---- wrapper-side layout plumbing (free reshapes / tiny zero pads) ----
    xf = jnp.pad(x.reshape(N, C, HW).astype(jnp.float32),
                 ((0, 0), (0, Cp - C), (0, 0)))

    def prep_w(w):
        # (O, I, 3, 3) -> (Cp, 9*Cp): column block t = ky*3+kx holds the (O, I)
        # tap matrix; zero padding keeps padded channels exactly zero.
        wt = jnp.transpose(w, (2, 3, 0, 1)).reshape(9, C, C)
        wt = jnp.pad(wt, ((0, 0), (0, Cp - C), (0, Cp - C)))
        return (jnp.transpose(wt, (1, 0, 2))
                .reshape(Cp, 9 * Cp).astype(matmul_dtype))

    kernel = _make_resblock_kernel(H, W, HW, C, Cp, base)

    # Generous per-sample VMEM estimate (double-buffered I/O + weights + the
    # line/stack scratch + temporaries); never below the 32 MiB default.
    est = 4 * (2 * Cp * HW + 2 * C * HW + 4 * 9 * Cp * Cp
               + Cp * buf_w + 9 * Cp * HW + 6 * Cp * HW)
    vmem_limit = min(max(2 * est, 32 * 1024 * 1024), 128 * 1024 * 1024)

    out = pl.pallas_call(
        kernel,
        grid=(N,),
        in_specs=[
            pl.BlockSpec((None, Cp, HW), lambda n: (n, 0, 0)),   # x (lane-dense)
            pl.BlockSpec((Cp, 9 * Cp), lambda n: (0, 0)),        # fused w1 taps
            pl.BlockSpec((Cp, 9 * Cp), lambda n: (0, 0)),        # fused w2 taps
        ],
        out_specs=pl.BlockSpec((None, C, HW), lambda n: (n, 0, 0)),
        out_shape=jax.ShapeDtypeStruct((N, C, HW), jnp.float32),
        scratch_shapes=[
            pltpu.VMEM((Cp, buf_w), jnp.float32),     # reflect-pad line buffer
            pltpu.VMEM((9 * Cp, HW), matmul_dtype),   # stacked conv windows
        ],
        compiler_params=pltpu.CompilerParams(
            dimension_semantics=("parallel",),
            vmem_limit_bytes=vmem_limit),
    )(xf, prep_w(w1), prep_w(w2))

    # TODO(synk): for very large C*H*W on v7x (64 MiB VMEM, 2 TensorCores) add
    # an H-tiled grid axis with a 1-row halo and two-sweep instance-norm stats,
    # and group the stacked windows 3 taps at a time to cut the stack buffer 3x.
    return out.reshape(N, C, H, W)


# ---------------- pure-JAX reference (for correctness check) ----------------
def _reference(x, w1, b1, w2, b2):
    def conv(inp, w, b):
        xp = jnp.pad(inp, ((0, 0), (0, 0), (1, 1), (1, 1)), mode="reflect")
        y = jax.lax.conv_general_dilated(
            xp, w, (1, 1), "VALID", dimension_numbers=("NCHW", "OIHW", "NCHW"))
        return y + b[None, :, None, None]

    def inorm(y):
        m = y.mean(axis=(2, 3), keepdims=True)
        v = ((y - m) ** 2).mean(axis=(2, 3), keepdims=True)
        return (y - m) / jnp.sqrt(v + EPS)

    h = jax.nn.relu(inorm(conv(x, w1, b1)))
    return x + inorm(conv(h, w2, b2))


if __name__ == "__main__":
    N, C, H, W = 2, 4, 16, 16
    key = jax.random.PRNGKey(0)
    kx, kw1, kb1, kw2, kb2 = jax.random.split(key, 5)

    x = jax.random.normal(kx, (N, C, H, W), jnp.float32)
    # deterministic synthetic parameters (Conv2d(C, C, 3) weights + biases)
    w1 = 0.2 * jax.random.normal(kw1, (C, C, 3, 3), jnp.float32)
    b1 = 0.1 * jax.random.normal(kb1, (C,), jnp.float32)
    w2 = 0.2 * jax.random.normal(kw2, (C, C, 3, 3), jnp.float32)
    b2 = 0.1 * jax.random.normal(kb2, (C,), jnp.float32)

    out = jax.block_until_ready(residual_block(x, w1, b1, w2, b2))
    ref = jax.block_until_ready(_reference(x, w1, b1, w2, b2))
    np.testing.assert_allclose(np.asarray(out), np.asarray(ref),
                               rtol=1e-4, atol=1e-4)
    print("KERNEL_OK")
</pallas_src>

<mosaic_0001>
module attributes {stable_mosaic.version = 11 : i64} {
  func.func @kernel(%arg0: i32, %arg1: memref<1x8x256xf32, #tpu.memory_space<vmem>>, %arg2: memref<8x72xf32, #tpu.memory_space<vmem>>, %arg3: memref<8x72xf32, #tpu.memory_space<vmem>>, %arg4: memref<1x4x256xf32, #tpu.memory_space<vmem>>, %arg5: memref<8x512xf32, #tpu.memory_space<vmem>>, %arg6: memref<72x256xf32, #tpu.memory_space<vmem>>) attributes {dimension_semantics = [#tpu.dimension_semantics<parallel>], iteration_bounds = array<i64: 2>, scalar_prefetch = 0 : i64, scratch_operands = 2 : i64, tpu.core_type = #tpu.core_type<tc>, window_params = [{transform_indices = @transform_0, window_bounds = array<i64: 1, 8, 256>}, {pipeline_mode = #tpu.pipeline_mode<synchronous>, transform_indices = @transform_1, window_bounds = array<i64: 8, 72>}, {pipeline_mode = #tpu.pipeline_mode<synchronous>, transform_indices = @transform_2, window_bounds = array<i64: 8, 72>}, {transform_indices = @transform_3, window_bounds = array<i64: 1, 4, 256>}]} {
    %0 = tpu.iota {dimensions = array<i32: 1>} : vector<1x256xi32>
    %c16_i32 = arith.constant 16 : i32
    %1 = vector.broadcast %c16_i32 : i32 to vector<1x256xi32>
    %2 = arith.remsi %0, %1 : vector<1x256xi32>
    %c16_i32_0 = arith.constant 16 : i32
    %3 = vector.broadcast %c16_i32_0 : i32 to vector<1x256xi32>
    %4 = arith.cmpi slt, %0, %3 : vector<1x256xi32>
    %c240_i32 = arith.constant 240 : i32
    %5 = vector.broadcast %c240_i32 : i32 to vector<1x256xi32>
    %6 = arith.cmpi sge, %0, %5 : vector<1x256xi32>
    %c0_i32 = arith.constant 0 : i32
    %7 = vector.broadcast %c0_i32 : i32 to vector<1x256xi32>
    %8 = arith.cmpi eq, %2, %7 : vector<1x256xi32>
    %c15_i32 = arith.constant 15 : i32
    %9 = vector.broadcast %c15_i32 : i32 to vector<1x256xi32>
    %10 = arith.cmpi eq, %2, %9 : vector<1x256xi32>
    %11 = arith.andi %4, %8 : vector<1x256xi1>
    %12 = arith.andi %4, %10 : vector<1x256xi1>
    %13 = arith.andi %6, %8 : vector<1x256xi1>
    %14 = arith.andi %6, %10 : vector<1x256xi1>
    %cst = arith.constant 0.000000e+00 : f32
    %15 = vector.broadcast %cst : f32 to vector<8x128xf32>
    %c0 = arith.constant 0 : index
    %c0_1 = arith.constant 0 : index
    %16 = vector.load %arg5[%c0, %c0_1] : memref<8x512xf32, #tpu.memory_space<vmem>>, vector<8x128xf32>
    tpu.vector_store %arg5[%c0, %c0_1], %15 {strides = array<i32>} : memref<8x512xf32, #tpu.memory_space<vmem>>, vector<8x128xf32>,
    %cst_2 = arith.constant 0.000000e+00 : f32
    %17 = vector.broadcast %cst_2 : f32 to vector<8x128xf32>
    %c0_3 = arith.constant 0 : index
    %c384 = arith.constant 384 : index
    %18 = vector.load %arg5[%c0_3, %c384] : memref<8x512xf32, #tpu.memory_space<vmem>>, vector<8x128xf32>
    tpu.vector_store %arg5[%c0_3, %c384], %17 {strides = array<i32>} : memref<8x512xf32, #tpu.memory_space<vmem>>, vector<8x128xf32>,
    %c0_4 = arith.constant 0 : index
    %c0_5 = arith.constant 0 : index
    %c0_6 = arith.constant 0 : index
    %19 = vector.load %arg1[%c0_4, %c0_5, %c0_6] : memref<1x8x256xf32, #tpu.memory_space<vmem>>, vector<1x8x256xf32>
    %20 = vector.shape_cast %19 : vector<1x8x256xf32> to vector<8x256xf32>
    %c0_7 = arith.constant 0 : index
    %c128 = arith.constant 128 : index
    %21 = vector.load %arg5[%c0_7, %c128] : memref<8x512xf32, #tpu.memory_space<vmem>>, vector<8x256xf32>
    tpu.vector_store %arg5[%c0_7, %c128], %20 {strides = array<i32>} : memref<8x512xf32, #tpu.memory_space<vmem>>, vector<8x256xf32>,
    %c0_8 = arith.constant 0 : index
    %c111 = arith.constant 111 : index
    %22 = vector.load %arg5[%c0_8, %c111] : memref<8x512xf32, #tpu.memory_space<vmem>>, vector<8x256xf32>
    %c0_9 = arith.constant 0 : index
    %c113 = arith.constant 113 : index
    %23 = vector.load %arg5[%c0_9, %c113] : memref<8x512xf32, #tpu.memory_space<vmem>>, vector<8x256xf32>
    %24 = vector.shape_cast %8 : vector<1x256xi1> to vector<1x256xi1>
    %25 = vector.broadcast %24 : vector<1x256xi1> to vector<8x256xi1>
    %26 = arith.select %25, %23, %22 : vector<8x256xi1>, vector<8x256xf32>
    %c0_10 = arith.constant 0 : index
    %c143 = arith.constant 143 : index
    %27 = vector.load %arg5[%c0_10, %c143] : memref<8x512xf32, #tpu.memory_space<vmem>>, vector<8x256xf32>
    %28 = vector.shape_cast %4 : vector<1x256xi1> to vector<1x256xi1>
    %29 = vector.broadcast %28 : vector<1x256xi1> to vector<8x256xi1>
    %30 = arith.select %29, %27, %26 : vector<8x256xi1>, vector<8x256xf32>
    %c0_11 = arith.constant 0 : index
    %c145 = arith.constant 145 : index
    %31 = vector.load %arg5[%c0_11, %c145] : memref<8x512xf32, #tpu.memory_space<vmem>>, vector<8x256xf32>
    %32 = vector.shape_cast %11 : vector<1x256xi1> to vector<1x256xi1>
    %33 = vector.broadcast %32 : vector<1x256xi1> to vector<8x256xi1>
    %34 = arith.select %33, %31, %30 : vector<8x256xi1>, vector<8x256xf32>
    %c0_12 = arith.constant 0 : index
    %c0_13 = arith.constant 0 : index
    %35 = vector.load %arg6[%c0_12, %c0_13] : memref<72x256xf32, #tpu.memory_space<vmem>>, vector<8x256xf32>
    tpu.vector_store %arg6[%c0_12, %c0_13], %34 {strides = array<i32>} : memref<72x256xf32, #tpu.memory_space<vmem>>, vector<8x256xf32>,
    %c0_14 = arith.constant 0 : index
    %c112 = arith.constant 112 : index
    %36 = vector.load %arg5[%c0_14, %c112] : memref<8x512xf32, #tpu.memory_space<vmem>>, vector<8x256xf32>
    %c0_15 = arith.constant 0 : index
    %c144 = arith.constant 144 : index
    %37 = vector.load %arg5[%c0_15, %c144] : memref<8x512xf32, #tpu.memory_space<vmem>>, vector<8x256xf32>
    %38 = vector.shape_cast %4 : vector<1x256xi1> to vector<1x256xi1>
    %39 = vector.broadcast %38 : vector<1x256xi1> to vector<8x256xi1>
    %40 = arith.select %39, %37, %36 : vector<8x256xi1>, vector<8x256xf32>
    %c8 = arith.constant 8 : index
    %c0_16 = arith.constant 0 : index
    %41 = vector.load %arg6[%c8, %c0_16] : memref<72x256xf32, #tpu.memory_space<vmem>>, vector<8x256xf32>
    tpu.vector_store %arg6[%c8, %c0_16], %40 {strides = array<i32>} : memref<72x256xf32, #tpu.memory_space<vmem>>, vector<8x256xf32>,
    %c0_17 = arith.constant 0 : index
    %c113_18 = arith.constant 113 : index
    %42 = vector.load %arg5[%c0_17, %c113_18] : memref<8x512xf32, #tpu.memory_space<vmem>>, vector<8x256xf32>
    %c0_19 = arith.constant 0 : index
    %c111_20 = arith.constant 111 : index
    %43 = vector.load %arg5[%c0_19, %c111_20] : memref<8x512xf32, #tpu.memory_space<vmem>>, vector<8x256xf32>
    %44 = vector.shape_cast %10 : vector<1x256xi1> to vector<1x256xi1>
    %45 = vector.broadcast %44 : vector<1x256xi1> to vector<8x256xi1>
    %46 = arith.select %45, %43, %42 : vector<8x256xi1>, vector<8x256xf32>
    %c0_21 = arith.constant 0 : index
    %c145_22 = arith.constant 145 : index
    %47 = vector.load %arg5[%c0_21, %c145_22] : memref<8x512xf32, #tpu.memory_space<vmem>>, vector<8x256xf32>
    %48 = vector.shape_cast %4 : vector<1x256xi1> to vector<1x256xi1>
    %49 = vector.broadcast %48 : vector<1x256xi1> to vector<8x256xi1>
    %50 = arith.select %49, %47, %46 : vector<8x256xi1>, vector<8x256xf32>
    %c0_23 = arith.constant 0 : index
    %c143_24 = arith.constant 143 : index
    %51 = vector.load %arg5[%c0_23, %c143_24] : memref<8x512xf32, #tpu.memory_space<vmem>>, vector<8x256xf32>
    %52 = vector.shape_cast %12 : vector<1x256xi1> to vector<1x256xi1>
    %53 = vector.broadcast %52 : vector<1x256xi1> to vector<8x256xi1>
    %54 = arith.select %53, %51, %50 : vector<8x256xi1>, vector<8x256xf32>
    %c16 = arith.constant 16 : index
    %c0_25 = arith.constant 0 : index
    %55 = vector.load %arg6[%c16, %c0_25] : memref<72x256xf32, #tpu.memory_space<vmem>>, vector<8x256xf32>
    tpu.vector_store %arg6[%c16, %c0_25], %54 {strides = array<i32>} : memref<72x256xf32, #tpu.memory_space<vmem>>, vector<8x256xf32>,
    %c0_26 = arith.constant 0 : index
    %c127 = arith.constant 127 : index
    %56 = vector.load %arg5[%c0_26, %c127] : memref<8x512xf32, #tpu.memory_space<vmem>>, vector<8x256xf32>
    %c0_27 = arith.constant 0 : index
    %c129 = arith.constant 129 : index
    %57 = vector.load %arg5[%c0_27, %c129] : memref<8x512xf32, #tpu.memory_space<vmem>>, vector<8x256xf32>
    %58 = vector.shape_cast %8 : vector<1x256xi1> to vector<1x256xi1>
    %59 = vector.broadcast %58 : vector<1x256xi1> to vector<8x256xi1>
    %60 = arith.select %59, %57, %56 : vector<8x256xi1>, vector<8x256xf32>
    %c24 = arith.constant 24 : index
    %c0_28 = arith.constant 0 : index
    %61 = vector.load %arg6[%c24, %c0_28] : memref<72x256xf32, #tpu.memory_space<vmem>>, vector<8x256xf32>
    tpu.vector_store %arg6[%c24, %c0_28], %60 {strides = array<i32>} : memref<72x256xf32, #tpu.memory_space<vmem>>, vector<8x256xf32>,
    %c0_29 = arith.constant 0 : index
    %c128_30 = arith.constant 128 : index
    %62 = vector.load %arg5[%c0_29, %c128_30] : memref<8x512xf32, #tpu.memory_space<vmem>>, vector<8x256xf32>
    %c32 = arith.constant 32 : index
    %c0_31 = arith.constant 0 : index
    %63 = vector.load %arg6[%c32, %c0_31] : memref<72x256xf32, #tpu.memory_space<vmem>>, vector<8x256xf32>
    tpu.vector_store %arg6[%c32, %c0_31], %62 {strides = array<i32>} : memref<72x256xf32, #tpu.memory_space<vmem>>, vector<8x256xf32>,
    %c0_32 = arith.constant 0 : index
    %c129_33 = arith.constant 129 : index
    %64 = vector.load %arg5[%c0_32, %c129_33] : memref<8x512xf32, #tpu.memory_space<vmem>>, vector<8x256xf32>
    %c0_34 = arith.constant 0 : index
    %c127_35 = arith.constant 127 : index
    %65 = vector.load %arg5[%c0_34, %c127_35] : memref<8x512xf32, #tpu.memory_space<vmem>>, vector<8x256xf32>
    %66 = vector.shape_cast %10 : vector<1x256xi1> to vector<1x256xi1>
    %67 = vector.broadcast %66 : vector<1x256xi1> to vector<8x256xi1>
    %68 = arith.select %67, %65, %64 : vector<8x256xi1>, vector<8x256xf32>
    %c40 = arith.constant 40 : index
    %c0_36 = arith.constant 0 : index
    %69 = vector.load %arg6[%c40, %c0_36] : memref<72x256xf32, #tpu.memory_space<vmem>>, vector<8x256xf32>
    tpu.vector_store %arg6[%c40, %c0_36], %68 {strides = array<i32>} : memref<72x256xf32, #tpu.memory_space<vmem>>, vector<8x256xf32>,
    %c0_37 = arith.constant 0 : index
    %c143_38 = arith.constant 143 : index
    %70 = vector.load %arg5[%c0_37, %c143_38] : memref<8x512xf32, #tpu.memory_space<vmem>>, vector<8x256xf32>
    %c0_39 = arith.constant 0 : index
    %c145_40 = arith.constant 145 : index
    %71 = vector.load %arg5[%c0_39, %c145_40] : memref<8x512xf32, #tpu.memory_space<vmem>>, vector<8x256xf32>
    %72 = vector.shape_cast %8 : vector<1x256xi1> to vector<1x256xi1>
    %73 = vector.broadcast %72 : vector<1x256xi1> to vector<8x256xi1>
    %74 = arith.select %73, %71, %70 : vector<8x256xi1>, vector<8x256xf32>
    %c0_41 = arith.constant 0 : index
    %c111_42 = arith.constant 111 : index
    %75 = vector.load %arg5[%c0_41, %c111_42] : memref<8x512xf32, #tpu.memory_space<vmem>>, vector<8x256xf32>
    %76 = vector.shape_cast %6 : vector<1x256xi1> to vector<1x256xi1>
    %77 = vector.broadcast %76 : vector<1x256xi1> to vector<8x256xi1>
    %78 = arith.select %77, %75, %74 : vector<8x256xi1>, vector<8x256xf32>
    %c0_43 = arith.constant 0 : index
    %c113_44 = arith.constant 113 : index
    %79 = vector.load %arg5[%c0_43, %c113_44] : memref<8x512xf32, #tpu.memory_space<vmem>>, vector<8x256xf32>
    %80 = vector.shape_cast %13 : vector<1x256xi1> to vector<1x256xi1>
    %81 = vector.broadcast %80 : vector<1x256xi1> to vector<8x256xi1>
    %82 = arith.select %81, %79, %78 : vector<8x256xi1>, vector<8x256xf32>
    %c48 = arith.constant 48 : index
    %c0_45 = arith.constant 0 : index
    %83 = vector.load %arg6[%c48, %c0_45] : memref<72x256xf32, #tpu.memory_space<vmem>>, vector<8x256xf32>
    tpu.vector_store %arg6[%c48, %c0_45], %82 {strides = array<i32>} : memref<72x256xf32, #tpu.memory_space<vmem>>, vector<8x256xf32>,
    %c0_46 = arith.constant 0 : index
    %c144_47 = arith.constant 144 : index
    %84 = vector.load %arg5[%c0_46, %c144_47] : memref<8x512xf32, #tpu.memory_space<vmem>>, vector<8x256xf32>
    %c0_48 = arith.constant 0 : index
    %c112_49 = arith.constant 112 : index
    %85 = vector.load %arg5[%c0_48, %c112_49] : memref<8x512xf32, #tpu.memory_space<vmem>>, vector<8x256xf32>
    %86 = vector.shape_cast %6 : vector<1x256xi1> to vector<1x256xi1>
    %87 = vector.broadcast %86 : vector<1x256xi1> to vector<8x256xi1>
    %88 = arith.select %87, %85, %84 : vector<8x256xi1>, vector<8x256xf32>
    %c56 = arith.constant 56 : index
    %c0_50 = arith.constant 0 : index
    %89 = vector.load %arg6[%c56, %c0_50] : memref<72x256xf32, #tpu.memory_space<vmem>>, vector<8x256xf32>
    tpu.vector_store %arg6[%c56, %c0_50], %88 {strides = array<i32>} : memref<72x256xf32, #tpu.memory_space<vmem>>, vector<8x256xf32>,
    %c0_51 = arith.constant 0 : index
    %c145_52 = arith.constant 145 : index
    %90 = vector.load %arg5[%c0_51, %c145_52] : memref<8x512xf32, #tpu.memory_space<vmem>>, vector<8x256xf32>
    %c0_53 = arith.constant 0 : index
    %c143_54 = arith.constant 143 : index
    %91 = vector.load %arg5[%c0_53, %c143_54] : memref<8x512xf32, #tpu.memory_space<vmem>>, vector<8x256xf32>
    %92 = vector.shape_cast %10 : vector<1x256xi1> to vector<1x256xi1>
    %93 = vector.broadcast %92 : vector<1x256xi1> to vector<8x256xi1>
    %94 = arith.select %93, %91, %90 : vector<8x256xi1>, vector<8x256xf32>
    %c0_55 = arith.constant 0 : index
    %c113_56 = arith.constant 113 : index
    %95 = vector.load %arg5[%c0_55, %c113_56] : memref<8x512xf32, #tpu.memory_space<vmem>>, vector<8x256xf32>
    %96 = vector.shape_cast %6 : vector<1x256xi1> to vector<1x256xi1>
    %97 = vector.broadcast %96 : vector<1x256xi1> to vector<8x256xi1>
    %98 = arith.select %97, %95, %94 : vector<8x256xi1>, vector<8x256xf32>
    %c0_57 = arith.constant 0 : index
    %c111_58 = arith.constant 111 : index
    %99 = vector.load %arg5[%c0_57, %c111_58] : memref<8x512xf32, #tpu.memory_space<vmem>>, vector<8x256xf32>
    %100 = vector.shape_cast %14 : vector<1x256xi1> to vector<1x256xi1>
    %101 = vector.broadcast %100 : vector<1x256xi1> to vector<8x256xi1>
    %102 = arith.select %101, %99, %98 : vector<8x256xi1>, vector<8x256xf32>
    %c64 = arith.constant 64 : index
    %c0_59 = arith.constant 0 : index
    %103 = vector.load %arg6[%c64, %c0_59] : memref<72x256xf32, #tpu.memory_space<vmem>>, vector<8x256xf32>
    tpu.vector_store %arg6[%c64, %c0_59], %102 {strides = array<i32>} : memref<72x256xf32, #tpu.memory_space<vmem>>, vector<8x256xf32>,
    %c0_60 = arith.constant 0 : index
    %c0_61 = arith.constant 0 : index
    %104 = vector.load %arg2[%c0_60, %c0_61] : memref<8x72xf32, #tpu.memory_space<vmem>>, vector<8x72xf32>
    %c0_62 = arith.constant 0 : index
    %c0_63 = arith.constant 0 : index
    %105 = vector.load %arg6[%c0_62, %c0_63] : memref<72x256xf32, #tpu.memory_space<vmem>>, vector<72x256xf32>
    %cst_64 = arith.constant dense<0.000000e+00> : vector<8x256xf32>
    %106 = tpu.matmul %104, %105, %cst_64 {dimension_numbers = #tpu.dot_dimension_numbers<[1], [0], [0], [1], [0, 0, 1, 1], [], []>} : vector<8x72xf32>, vector<72x256xf32>, vector<8x256xf32> -> vector<8x256xf32>
    %cst_65 = arith.constant dense<0.000000e+00> : vector<8xf32>
    %107 = vector.multi_reduction <add>, %106, %cst_65 [1] : vector<8x256xf32> to vector<8xf32>
    %108 = vector.shape_cast %107 : vector<8xf32> to vector<8x1xf32>
    %cst_66 = arith.constant 3.906250e-03 : f32
    %109 = vector.broadcast %cst_66 : f32 to vector<8x1xf32>
    %110 = arith.mulf %108, %109 : vector<8x1xf32>
    %111 = arith.mulf %106, %106 : vector<8x256xf32>
    %cst_67 = arith.constant dense<0.000000e+00> : vector<8xf32>
    %112 = vector.multi_reduction <add>, %111, %cst_67 [1] : vector<8x256xf32> to vector<8xf32>
    %113 = vector.shape_cast %112 : vector<8xf32> to vector<8x1xf32>
    %cst_68 = arith.constant 3.906250e-03 : f32
    %114 = vector.broadcast %cst_68 : f32 to vector<8x1xf32>
    %115 = arith.mulf %113, %114 : vector<8x1xf32>
    %116 = arith.mulf %110, %110 : vector<8x1xf32>
    %117 = arith.subf %115, %116 : vector<8x1xf32>
    %118 = vector.broadcast %110 : vector<8x1xf32> to vector<8x256xf32>
    %119 = arith.subf %106, %118 : vector<8x256xf32>
    %cst_69 = arith.constant 9.99999974E-6 : f32
    %120 = vector.broadcast %cst_69 : f32 to vector<8x1xf32>
    %121 = arith.addf %117, %120 : vector<8x1xf32>
    %122 = math.rsqrt %121 : vector<8x1xf32>
    %123 = vector.broadcast %122 : vector<8x1xf32> to vector<8x256xf32>
    %124 = arith.mulf %119, %123 : vector<8x256xf32>
    %cst_70 = arith.constant 0.000000e+00 : f32
    %125 = vector.broadcast %cst_70 : f32 to vector<8x256xf32>
    %126 = arith.maximumf %124, %125 : vector<8x256xf32>
    %c0_71 = arith.constant 0 : index
    %c128_72 = arith.constant 128 : index
    %127 = vector.load %arg5[%c0_71, %c128_72] : memref<8x512xf32, #tpu.memory_space<vmem>>, vector<8x256xf32>
    tpu.vector_store %arg5[%c0_71, %c128_72], %126 {strides = array<i32>} : memref<8x512xf32, #tpu.memory_space<vmem>>, vector<8x256xf32>,
    %c0_73 = arith.constant 0 : index
    %c111_74 = arith.constant 111 : index
    %128 = vector.load %arg5[%c0_73, %c111_74] : memref<8x512xf32, #tpu.memory_space<vmem>>, vector<8x256xf32>
    %c0_75 = arith.constant 0 : index
    %c113_76 = arith.constant 113 : index
    %129 = vector.load %arg5[%c0_75, %c113_76] : memref<8x512xf32, #tpu.memory_space<vmem>>, vector<8x256xf32>
    %130 = vector.shape_cast %8 : vector<1x256xi1> to vector<1x256xi1>
    %131 = vector.broadcast %130 : vector<1x256xi1> to vector<8x256xi1>
    %132 = arith.select %131, %129, %128 : vector<8x256xi1>, vector<8x256xf32>
    %c0_77 = arith.constant 0 : index
    %c143_78 = arith.constant 143 : index
    %133 = vector.load %arg5[%c0_77, %c143_78] : memref<8x512xf32, #tpu.memory_space<vmem>>, vector<8x256xf32>
    %134 = vector.shape_cast %4 : vector<1x256xi1> to vector<1x256xi1>
    %135 = vector.broadcast %134 : vector<1x256xi1> to vector<8x256xi1>
    %136 = arith.select %135, %133, %132 : vector<8x256xi1>, vector<8x256xf32>
    %c0_79 = arith.constant 0 : index
    %c145_80 = arith.constant 145 : index
    %137 = vector.load %arg5[%c0_79, %c145_80] : memref<8x512xf32, #tpu.memory_space<vmem>>, vector<8x256xf32>
    %138 = vector.shape_cast %11 : vector<1x256xi1> to vector<1x256xi1>
    %139 = vector.broadcast %138 : vector<1x256xi1> to vector<8x256xi1>
    %140 = arith.select %139, %137, %136 : vector<8x256xi1>, vector<8x256xf32>
    %c0_81 = arith.constant 0 : index
    %c0_82 = arith.constant 0 : index
    %141 = vector.load %arg6[%c0_81, %c0_82] : memref<72x256xf32, #tpu.memory_space<vmem>>, vector<8x256xf32>
    tpu.vector_store %arg6[%c0_81, %c0_82], %140 {strides = array<i32>} : memref<72x256xf32, #tpu.memory_space<vmem>>, vector<8x256xf32>,
    %c0_83 = arith.constant 0 : index
    %c112_84 = arith.constant 112 : index
    %142 = vector.load %arg5[%c0_83, %c112_84] : memref<8x512xf32, #tpu.memory_space<vmem>>, vector<8x256xf32>
    %c0_85 = arith.constant 0 : index
    %c144_86 = arith.constant 144 : index
    %143 = vector.load %arg5[%c0_85, %c144_86] : memref<8x512xf32, #tpu.memory_space<vmem>>, vector<8x256xf32>
    %144 = vector.shape_cast %4 : vector<1x256xi1> to vector<1x256xi1>
    %145 = vector.broadcast %144 : vector<1x256xi1> to vector<8x256xi1>
    %146 = arith.select %145, %143, %142 : vector<8x256xi1>, vector<8x256xf32>
    %c8_87 = arith.constant 8 : index
    %c0_88 = arith.constant 0 : index
    %147 = vector.load %arg6[%c8_87, %c0_88] : memref<72x256xf32, #tpu.memory_space<vmem>>, vector<8x256xf32>
    tpu.vector_store %arg6[%c8_87, %c0_88], %146 {strides = array<i32>} : memref<72x256xf32, #tpu.memory_space<vmem>>, vector<8x256xf32>,
    %c0_89 = arith.constant 0 : index
    %c113_90 = arith.constant 113 : index
    %148 = vector.load %arg5[%c0_89, %c113_90] : memref<8x512xf32, #tpu.memory_space<vmem>>, vector<8x256xf32>
    %c0_91 = arith.constant 0 : index
    %c111_92 = arith.constant 111 : index
    %149 = vector.load %arg5[%c0_91, %c111_92] : memref<8x512xf32, #tpu.memory_space<vmem>>, vector<8x256xf32>
    %150 = vector.shape_cast %10 : vector<1x256xi1> to vector<1x256xi1>
    %151 = vector.broadcast %150 : vector<1x256xi1> to vector<8x256xi1>
    %152 = arith.select %151, %149, %148 : vector<8x256xi1>, vector<8x256xf32>
    %c0_93 = arith.constant 0 : index
    %c145_94 = arith.constant 145 : index
    %153 = vector.load %arg5[%c0_93, %c145_94] : memref<8x512xf32, #tpu.memory_space<vmem>>, vector<8x256xf32>
    %154 = vector.shape_cast %4 : vector<1x256xi1> to vector<1x256xi1>
    %155 = vector.broadcast %154 : vector<1x256xi1> to vector<8x256xi1>
    %156 = arith.select %155, %153, %152 : vector<8x256xi1>, vector<8x256xf32>
    %c0_95 = arith.constant 0 : index
    %c143_96 = arith.constant 143 : index
    %157 = vector.load %arg5[%c0_95, %c143_96] : memref<8x512xf32, #tpu.memory_space<vmem>>, vector<8x256xf32>
    %158 = vector.shape_cast %12 : vector<1x256xi1> to vector<1x256xi1>
    %159 = vector.broadcast %158 : vector<1x256xi1> to vector<8x256xi1>
    %160 = arith.select %159, %157, %156 : vector<8x256xi1>, vector<8x256xf32>
    %c16_97 = arith.constant 16 : index
    %c0_98 = arith.constant 0 : index
    %161 = vector.load %arg6[%c16_97, %c0_98] : memref<72x256xf32, #tpu.memory_space<vmem>>, vector<8x256xf32>
    tpu.vector_store %arg6[%c16_97, %c0_98], %160 {strides = array<i32>} : memref<72x256xf32, #tpu.memory_space<vmem>>, vector<8x256xf32>,
    %c0_99 = arith.constant 0 : index
    %c127_100 = arith.constant 127 : index
    %162 = vector.load %arg5[%c0_99, %c127_100] : memref<8x512xf32, #tpu.memory_space<vmem>>, vector<8x256xf32>
    %c0_101 = arith.constant 0 : index
    %c129_102 = arith.constant 129 : index
    %163 = vector.load %arg5[%c0_101, %c129_102] : memref<8x512xf32, #tpu.memory_space<vmem>>, vector<8x256xf32>
    %164 = vector.shape_cast %8 : vector<1x256xi1> to vector<1x256xi1>
    %165 = vector.broadcast %164 : vector<1x256xi1> to vector<8x256xi1>
    %166 = arith.select %165, %163, %162 : vector<8x256xi1>, vector<8x256xf32>
    %c24_103 = arith.constant 24 : index
    %c0_104 = arith.constant 0 : index
    %167 = vector.load %arg6[%c24_103, %c0_104] : memref<72x256xf32, #tpu.memory_space<vmem>>, vector<8x256xf32>
    tpu.vector_store %arg6[%c24_103, %c0_104], %166 {strides = array<i32>} : memref<72x256xf32, #tpu.memory_space<vmem>>, vector<8x256xf32>,
    %c0_105 = arith.constant 0 : index
    %c128_106 = arith.constant 128 : index
    %168 = vector.load %arg5[%c0_105, %c128_106] : memref<8x512xf32, #tpu.memory_space<vmem>>, vector<8x256xf32>
    %c32_107 = arith.constant 32 : index
    %c0_108 = arith.constant 0 : index
    %169 = vector.load %arg6[%c32_107, %c0_108] : memref<72x256xf32, #tpu.memory_space<vmem>>, vector<8x256xf32>
    tpu.vector_store %arg6[%c32_107, %c0_108], %168 {strides = array<i32>} : memref<72x256xf32, #tpu.memory_space<vmem>>, vector<8x256xf32>,
    %c0_109 = arith.constant 0 : index
    %c129_110 = arith.constant 129 : index
    %170 = vector.load %arg5[%c0_109, %c129_110] : memref<8x512xf32, #tpu.memory_space<vmem>>, vector<8x256xf32>
    %c0_111 = arith.constant 0 : index
    %c127_112 = arith.constant 127 : index
    %171 = vector.load %arg5[%c0_111, %c127_112] : memref<8x512xf32, #tpu.memory_space<vmem>>, vector<8x256xf32>
    %172 = vector.shape_cast %10 : vector<1x256xi1> to vector<1x256xi1>
    %173 = vector.broadcast %172 : vector<1x256xi1> to vector<8x256xi1>
    %174 = arith.select %173, %171, %170 : vector<8x256xi1>, vector<8x256xf32>
    %c40_113 = arith.constant 40 : index
    %c0_114 = arith.constant 0 : index
    %175 = vector.load %arg6[%c40_113, %c0_114] : memref<72x256xf32, #tpu.memory_space<vmem>>, vector<8x256xf32>
    tpu.vector_store %arg6[%c40_113, %c0_114], %174 {strides = array<i32>} : memref<72x256xf32, #tpu.memory_space<vmem>>, vector<8x256xf32>,
    %c0_115 = arith.constant 0 : index
    %c143_116 = arith.constant 143 : index
    %176 = vector.load %arg5[%c0_115, %c143_116] : memref<8x512xf32, #tpu.memory_space<vmem>>, vector<8x256xf32>
    %c0_117 = arith.constant 0 : index
    %c145_118 = arith.constant 145 : index
    %177 = vector.load %arg5[%c0_117, %c145_118] : memref<8x512xf32, #tpu.memory_space<vmem>>, vector<8x256xf32>
    %178 = vector.shape_cast %8 : vector<1x256xi1> to vector<1x256xi1>
    %179 = vector.broadcast %178 : vector<1x256xi1> to vector<8x256xi1>
    %180 = arith.select %179, %177, %176 : vector<8x256xi1>, vector<8x256xf32>
    %c0_119 = arith.constant 0 : index
    %c111_120 = arith.constant 111 : index
    %181 = vector.load %arg5[%c0_119, %c111_120] : memref<8x512xf32, #tpu.memory_space<vmem>>, vector<8x256xf32>
    %182 = vector.shape_cast %6 : vector<1x256xi1> to vector<1x256xi1>
    %183 = vector.broadcast %182 : vector<1x256xi1> to vector<8x256xi1>
    %184 = arith.select %183, %181, %180 : vector<8x256xi1>, vector<8x256xf32>
    %c0_121 = arith.constant 0 : index
    %c113_122 = arith.constant 113 : index
    %185 = vector.load %arg5[%c0_121, %c113_122] : memref<8x512xf32, #tpu.memory_space<vmem>>, vector<8x256xf32>
    %186 = vector.shape_cast %13 : vector<1x256xi1> to vector<1x256xi1>
    %187 = vector.broadcast %186 : vector<1x256xi1> to vector<8x256xi1>
    %188 = arith.select %187, %185, %184 : vector<8x256xi1>, vector<8x256xf32>
    %c48_123 = arith.constant 48 : index
    %c0_124 = arith.constant 0 : index
    %189 = vector.load %arg6[%c48_123, %c0_124] : memref<72x256xf32, #tpu.memory_space<vmem>>, vector<8x256xf32>
    tpu.vector_store %arg6[%c48_123, %c0_124], %188 {strides = array<i32>} : memref<72x256xf32, #tpu.memory_space<vmem>>, vector<8x256xf32>,
    %c0_125 = arith.constant 0 : index
    %c144_126 = arith.constant 144 : index
    %190 = vector.load %arg5[%c0_125, %c144_126] : memref<8x512xf32, #tpu.memory_space<vmem>>, vector<8x256xf32>
    %c0_127 = arith.constant 0 : index
    %c112_128 = arith.constant 112 : index
    %191 = vector.load %arg5[%c0_127, %c112_128] : memref<8x512xf32, #tpu.memory_space<vmem>>, vector<8x256xf32>
    %192 = vector.shape_cast %6 : vector<1x256xi1> to vector<1x256xi1>
    %193 = vector.broadcast %192 : vector<1x256xi1> to vector<8x256xi1>
    %194 = arith.select %193, %191, %190 : vector<8x256xi1>, vector<8x256xf32>
    %c56_129 = arith.constant 56 : index
    %c0_130 = arith.constant 0 : index
    %195 = vector.load %arg6[%c56_129, %c0_130] : memref<72x256xf32, #tpu.memory_space<vmem>>, vector<8x256xf32>
    tpu.vector_store %arg6[%c56_129, %c0_130], %194 {strides = array<i32>} : memref<72x256xf32, #tpu.memory_space<vmem>>, vector<8x256xf32>,
    %c0_131 = arith.constant 0 : index
    %c145_132 = arith.constant 145 : index
    %196 = vector.load %arg5[%c0_131, %c145_132] : memref<8x512xf32, #tpu.memory_space<vmem>>, vector<8x256xf32>
    %c0_133 = arith.constant 0 : index
    %c143_134 = arith.constant 143 : index
    %197 = vector.load %arg5[%c0_133, %c143_134] : memref<8x512xf32, #tpu.memory_space<vmem>>, vector<8x256xf32>
    %198 = vector.shape_cast %10 : vector<1x256xi1> to vector<1x256xi1>
    %199 = vector.broadcast %198 : vector<1x256xi1> to vector<8x256xi1>
    %200 = arith.select %199, %197, %196 : vector<8x256xi1>, vector<8x256xf32>
    %c0_135 = arith.constant 0 : index
    %c113_136 = arith.constant 113 : index
    %201 = vector.load %arg5[%c0_135, %c113_136] : memref<8x512xf32, #tpu.memory_space<vmem>>, vector<8x256xf32>
    %202 = vector.shape_cast %6 : vector<1x256xi1> to vector<1x256xi1>
    %203 = vector.broadcast %202 : vector<1x256xi1> to vector<8x256xi1>
    %204 = arith.select %203, %201, %200 : vector<8x256xi1>, vector<8x256xf32>
    %c0_137 = arith.constant 0 : index
    %c111_138 = arith.constant 111 : index
    %205 = vector.load %arg5[%c0_137, %c111_138] : memref<8x512xf32, #tpu.memory_space<vmem>>, vector<8x256xf32>
    %206 = vector.shape_cast %14 : vector<1x256xi1> to vector<1x256xi1>
    %207 = vector.broadcast %206 : vector<1x256xi1> to vector<8x256xi1>
    %208 = arith.select %207, %205, %204 : vector<8x256xi1>, vector<8x256xf32>
    %c64_139 = arith.constant 64 : index
    %c0_140 = arith.constant 0 : index
    %209 = vector.load %arg6[%c64_139, %c0_140] : memref<72x256xf32, #tpu.memory_space<vmem>>, vector<8x256xf32>
    tpu.vector_store %arg6[%c64_139, %c0_140], %208 {strides = array<i32>} : memref<72x256xf32, #tpu.memory_space<vmem>>, vector<8x256xf32>,
    %c0_141 = arith.constant 0 : index
    %c0_142 = arith.constant 0 : index
    %210 = vector.load %arg3[%c0_141, %c0_142] : memref<8x72xf32, #tpu.memory_space<vmem>>, vector<8x72xf32>
    %c0_143 = arith.constant 0 : index
    %c0_144 = arith.constant 0 : index
    %211 = vector.load %arg6[%c0_143, %c0_144] : memref<72x256xf32, #tpu.memory_space<vmem>>, vector<72x256xf32>
    %cst_145 = arith.constant dense<0.000000e+00> : vector<8x256xf32>
    %212 = tpu.matmul %210, %211, %cst_145 {dimension_numbers = #tpu.dot_dimension_numbers<[1], [0], [0], [1], [0, 0, 1, 1], [], []>} : vector<8x72xf32>, vector<72x256xf32>, vector<8x256xf32> -> vector<8x256xf32>
    %cst_146 = arith.constant dense<0.000000e+00> : vector<8xf32>
    %213 = vector.multi_reduction <add>, %212, %cst_146 [1] : vector<8x256xf32> to vector<8xf32>
    %214 = vector.shape_cast %213 : vector<8xf32> to vector<8x1xf32>
    %cst_147 = arith.constant 3.906250e-03 : f32
    %215 = vector.broadcast %cst_147 : f32 to vector<8x1xf32>
    %216 = arith.mulf %214, %215 : vector<8x1xf32>
    %217 = arith.mulf %212, %212 : vector<8x256xf32>
    %cst_148 = arith.constant dense<0.000000e+00> : vector<8xf32>
    %218 = vector.multi_reduction <add>, %217, %cst_148 [1] : vector<8x256xf32> to vector<8xf32>
    %219 = vector.shape_cast %218 : vector<8xf32> to vector<8x1xf32>
    %cst_149 = arith.constant 3.906250e-03 : f32
    %220 = vector.broadcast %cst_149 : f32 to vector<8x1xf32>
    %221 = arith.mulf %219, %220 : vector<8x1xf32>
    %222 = arith.mulf %216, %216 : vector<8x1xf32>
    %223 = arith.subf %221, %222 : vector<8x1xf32>
    %224 = vector.broadcast %216 : vector<8x1xf32> to vector<8x256xf32>
    %225 = arith.subf %212, %224 : vector<8x256xf32>
    %cst_150 = arith.constant 9.99999974E-6 : f32
    %226 = vector.broadcast %cst_150 : f32 to vector<8x1xf32>
    %227 = arith.addf %223, %226 : vector<8x1xf32>
    %228 = math.rsqrt %227 : vector<8x1xf32>
    %229 = vector.broadcast %228 : vector<8x1xf32> to vector<8x256xf32>
    %230 = arith.mulf %225, %229 : vector<8x256xf32>
    %c0_151 = arith.constant 0 : index
    %c0_152 = arith.constant 0 : index
    %c0_153 = arith.constant 0 : index
    %231 = vector.load %arg1[%c0_151, %c0_152, %c0_153] : memref<1x8x256xf32, #tpu.memory_space<vmem>>, vector<1x8x256xf32>
    %232 = vector.shape_cast %231 : vector<1x8x256xf32> to vector<8x256xf32>
    %233 = arith.addf %232, %230 : vector<8x256xf32>
    %234 = vector.extract_strided_slice %233 {offsets = [0, 0], sizes = [4, 256], strides = [1, 1]} : vector<8x256xf32> to vector<4x256xf32>
    %c0_154 = arith.constant 0 : index
    %c0_155 = arith.constant 0 : index
    %c0_156 = arith.constant 0 : index
    %235 = vector.load %arg4[%c0_154, %c0_155, %c0_156] : memref<1x4x256xf32, #tpu.memory_space<vmem>>, vector<1x4x256xf32>
    %236 = vector.shape_cast %235 : vector<1x4x256xf32> to vector<4x256xf32>
    %237 = vector.shape_cast %234 : vector<4x256xf32> to vector<1x4x256xf32>
    tpu.vector_store %arg4[%c0_154, %c0_155, %c0_156], %237 {strides = array<i32>} : memref<1x4x256xf32, #tpu.memory_space<vmem>>, vector<1x4x256xf32>,
    return
  }
  func.func @transform_0(%arg0: i32) -> (i32, i32, i32) {
    %c0_i32 = arith.constant 0 : i32
    %c0_i32_0 = arith.constant 0 : i32
    %c0_i32_1 = arith.constant 0 : i32
    return %arg0, %c0_i32, %c0_i32_0 : i32, i32, i32
  }
  func.func @transform_1(%arg0: i32) -> (i32, i32) {
    %c0_i32 = arith.constant 0 : i32
    %c0_i32_0 = arith.constant 0 : i32
    %c0_i32_1 = arith.constant 0 : i32
    return %c0_i32, %c0_i32_0 : i32, i32
  }
  func.func @transform_2(%arg0: i32) -> (i32, i32) {
    %c0_i32 = arith.constant 0 : i32
    %c0_i32_0 = arith.constant 0 : i32
    %c0_i32_1 = arith.constant 0 : i32
    return %c0_i32, %c0_i32_0 : i32, i32
  }
  func.func @transform_3(%arg0: i32) -> (i32, i32, i32) {
    %c0_i32 = arith.constant 0 : i32
    %c0_i32_0 = arith.constant 0 : i32
    %c0_i32_1 = arith.constant 0 : i32
    return %arg0, %c0_i32, %c0_i32_0 : i32, i32, i32
  }
}

</mosaic_0001>

<llo_original>
// kernel: tpu_custom_call.1
$region0: #{tpu_custom_call.1}
  #allocation0 [shape = 'u32[]', space=smem, size = 0x4, offset = 0x4, fixed_abs, tag = 'smem constant byte address 0x4 - core index']
  #allocation1 [shape = 'u32[144,128]{1,0:T(1,128)}', space=vmem, size = 0x12000, scoped, tag = 'internal scratch']
  #allocation2 [shape = 'f32[8,512]{1,0:T(8,128)}', space=vmem, size = 0x4000, scoped, tag = 'scratch operand']
  #allocation3 [shape = 'f32[72,256]{1,0:T(8,128)}', space=vmem, size = 0x12000, scoped, tag = 'scratch operand']
  %s0 = inlined_call_operand.hbm [shape: f32[2,8,256], index: 0, kind: input, shape index: {}]
  %s1 = inlined_call_operand.hbm [shape: f32[8,72], index: 1, kind: input, shape index: {}]
  %s2 = inlined_call_operand.hbm [shape: f32[8,72], index: 2, kind: input, shape index: {}]
  %s3 = inlined_call_operand.hbm [shape: f32[2,4,256], index: 3, kind: output, shape index: {}]
  %s4 = sld [smem:[#allocation0]]
  $region57: #{tpu_custom_call.1} parent=0
    _
  %s6 = ssub.s32 1, %s4
  %s7 = scalar_select 0, %s6, %s4
  $region1: #{tpu_custom_call.1} parent=0
    #allocation4 [shape = 'u8[16384]{0}', space=vmem, size = 0x4000, scoped, tag = 'input window, operand 0']
    #allocation5 [shape = 's32[2]{0}', space=sflag, size = 0x8, scoped, tag = 'scoped memory for tpu_custom_call.1']
    #allocation6 [shape = 's32[2]{0}', space=sflag, size = 0x8, scoped, tag = 'scoped memory for tpu_custom_call.1']
    #allocation7 [shape = 'u8[4096]{0}', space=vmem, size = 0x1000, scoped, tag = 'input window, operand 1, single buffered']
    #allocation8 [shape = 's32[1]{0}', space=sflag, size = 0x4, scoped, tag = 'scoped memory for tpu_custom_call.1']
    #allocation9 [shape = 'u8[4096]{0}', space=vmem, size = 0x1000, scoped, tag = 'input window, operand 2, single buffered']
    #allocation10 [shape = 'u8[8192]{0}', space=vmem, size = 0x2000, scoped, tag = 'output window, operand 0']
    %8 = vsyncpa [#allocation5], 0
    %s9 = scalar_lea.sflag [#allocation5], 1
    %10 = vsyncpa %s9, 0
    %11 = vsyncpa [#allocation8], 0
    %12 = vsyncpa [#allocation6], 0
    %s13 = scalar_lea.sflag [#allocation6], 1
    %14 = vsyncpa %s13, 0
    loop: start=0, step=1, limit=4
    $region2: #{tpu_custom_call.1} parent=1 // loop_pre_header
      _
    $region3: #{tpu_custom_call.1} parent=1 // loop_header
      %s16 = sphi 0, %s20
      %p17 = scmp.ge.s32.totalorder %s16, 4
      %s26 = sphi 0, %s28
      %s29 = sphi 0, %s26
      %s30 = sphi 0, %s29
      %s46 = sphi 0, %s30
      %s50 = sphi 0, %s50
      %s52 = sphi 0, %s50
      %s53 = sphi 0, %s52
      %s67 = sphi 0, %s53
      %s71 = sphi 0, %s71
      %s73 = sphi 0, %s71
      %s74 = sphi 0, %s73
      %s88 = sphi 0, %s74
      %s94 = sphi 0, %s96
      %s97 = sphi 0, %s94
      %s98 = sphi 0, %s97
      %s114 = sphi 0, %s98
    $region4: #{tpu_custom_call.1} parent=1 // loop_header_branch
      %19 = sbr.rel (%p17) target = $region8
    $region5: #{tpu_custom_call.1} parent=1 // loop_body
      %s21 = ssub.s32 %s16, 1
      %s22 = ssub.s32 %s16, 2
      %s23 = sadd.s32 %s16, 1
      %s24 = ssub.s32 %s16, %s23
      %p25 = scmp.eq.s32.totalorder %s24, 0
      %s27 = sadd.s32 %s26, 1
      %s28 = scalar_select %p25, %s26, %s27
      %p31 = pneg %p25
      %p32 = scmp.eq.s32.totalorder %s16, 1
      %p33 = por %p31, %p32
      %p34 = scmp.ne.s32.totalorder %s26, %s29
      %p35 = scmp.eq.s32.totalorder %s16, 0
      %p36 = por %p34, %p35
      %p37 = scmp.ne.s32.totalorder %s26, %s29
      %p38 = scmp.eq.s32.totalorder %s21, 1
      %p39 = por %p37, %p38
      %p40 = scmp.ne.s32.totalorder %s29, %s30
      %p41 = scmp.eq.s32.totalorder %s21, 0
      %p42 = por %p40, %p41
      %p43 = scmp.ne.s32.totalorder %s29, %s30
      %p44 = scmp.eq.s32.totalorder %s22, 1
      %p45 = por %p43, %p44
      %p47 = scmp.ne.s32.totalorder %s30, %s46
      %p48 = scmp.eq.s32.totalorder %s22, 0
      %p49 = por %p47, %p48
      %s51 = sadd.s32 %s50, 1
      %p54 = scmp.eq.s32.totalorder %s16, 1
      %p55 = scmp.ne.s32.totalorder %s50, %s52
      %p56 = scmp.eq.s32.totalorder %s16, 0
      %p57 = por %p55, %p56
      %p58 = scmp.ne.s32.totalorder %s50, %s52
      %p59 = scmp.eq.s32.totalorder %s21, 1
      %p60 = por %p58, %p59
      %p61 = scmp.ne.s32.totalorder %s52, %s53
      %p62 = scmp.eq.s32.totalorder %s21, 0
      %p63 = por %p61, %p62
      %p64 = scmp.ne.s32.totalorder %s52, %s53
      %p65 = scmp.eq.s32.totalorder %s22, 1
      %p66 = por %p64, %p65
      %p68 = scmp.ne.s32.totalorder %s53, %s67
      %p69 = scmp.eq.s32.totalorder %s22, 0
      %p70 = por %p68, %p69
      %s72 = sadd.s32 %s71, 1
      %p75 = scmp.eq.s32.totalorder %s16, 1
      %p76 = scmp.ne.s32.totalorder %s71, %s73
      %p77 = scmp.eq.s32.totalorder %s16, 0
      %p78 = por %p76, %p77
      %p79 = scmp.ne.s32.totalorder %s71, %s73
      %p80 = scmp.eq.s32.totalorder %s21, 1
      %p81 = por %p79, %p80
      %p82 = scmp.ne.s32.totalorder %s73, %s74
      %p83 = scmp.eq.s32.totalorder %s21, 0
      %p84 = por %p82, %p83
      %p85 = scmp.ne.s32.totalorder %s73, %s74
      %p86 = scmp.eq.s32.totalorder %s22, 1
      %p87 = por %p85, %p86
      %p89 = scmp.ne.s32.totalorder %s74, %s88
      %p90 = scmp.eq.s32.totalorder %s22, 0
      %p91 = por %p89, %p90
      %s92 = ssub.s32 %s16, %s23
      %p93 = scmp.eq.s32.totalorder %s92, 0
      %s95 = sadd.s32 %s94, 1
      %s96 = scalar_select %p93, %s94, %s95
      %p99 = pneg %p93
      %p100 = scmp.eq.s32.totalorder %s16, 1
      %p101 = por %p99, %p100
      %p102 = scmp.ne.s32.totalorder %s94, %s97
      %p103 = scmp.eq.s32.totalorder %s16, 0
      %p104 = por %p102, %p103
      %p105 = scmp.ne.s32.totalorder %s94, %s97
      %p106 = scmp.eq.s32.totalorder %s21, 1
      %p107 = por %p105, %p106
      %p108 = scmp.ne.s32.totalorder %s97, %s98
      %p109 = scmp.eq.s32.totalorder %s21, 0
      %p110 = por %p108, %p109
      %p111 = scmp.ne.s32.totalorder %s97, %s98
      %p112 = scmp.eq.s32.totalorder %s22, 1
      %p113 = por %p111, %p112
      %p115 = scmp.ne.s32.totalorder %s98, %s114
      %p116 = scmp.eq.s32.totalorder %s22, 0
      %p117 = por %p115, %p116
      %p118 = scmp.le.s32.totalorder 1, %s16
      %p119 = scmp.lt.s32.totalorder %s16, 3
      %p120 = pnand %p118, %p119
      %p121 = pneg %p120
      // Predicated region
      $region9: #{tpu_custom_call.1} parent=5 // pred_check
        _
      $region10: #{tpu_custom_call.1} parent=5 // pred_check_branch
        %123 = sbr.rel (%p120) target = $region12
      $region11: #{tpu_custom_call.1} parent=5 // pred_region
        %s124 = ssub.s32 %s16, 1
        // Predicated region
        $region13: #{tpu_custom_call.1} parent=11 // pred_check
          %p125 = pneg %p63
        $region14: #{tpu_custom_call.1} parent=11 // pred_check_branch
          %127 = sbr.rel (%p125) target = $region16
        $region15: #{tpu_custom_call.1} parent=11 // pred_region
          %s129 = ssub.s32 128, 128
          %130 = vsyncadd [#allocation8], %s129
          %s132 = sshll.u32 [#allocation7], 4
          %s133 = int_to_ptr.vmem [resolvable:$true] %s132
          %135 = dma.hbm_to_vmem [thread:$0]  %s1, 128, %s133, [#allocation8]
        $region16: #{tpu_custom_call.1} parent=11 // pred_fallthru
          _
        // Predicated region
        $region17: #{tpu_custom_call.1} parent=11 // pred_check
          %p136 = pneg %p84
        $region18: #{tpu_custom_call.1} parent=11 // pred_check_branch
          %138 = sbr.rel (%p136) target = $region20
        $region19: #{tpu_custom_call.1} parent=11 // pred_region
          %s140 = ssub.s32 128, 128
          %141 = vsyncadd [#allocation8], %s140
          %s143 = sshll.u32 [#allocation9], 4
          %s144 = int_to_ptr.vmem [resolvable:$true] %s143
          %146 = dma.hbm_to_vmem [thread:$0]  %s2, 128, %s144, [#allocation8]
        $region20: #{tpu_custom_call.1} parent=11 // pred_fallthru
          _
      $region12: #{tpu_custom_call.1} parent=5 // pred_fallthru
        _
      %p147 = scmp.lt.s32.totalorder %s16, 2
      // Predicated region
      $region21: #{tpu_custom_call.1} parent=5 // pred_check
        %p148 = pneg %p147
      $region22: #{tpu_custom_call.1} parent=5 // pred_check_branch
        %150 = sbr.rel (%p148) target = $region24
      $region23: #{tpu_custom_call.1} parent=5 // pred_region
        // Predicated region
        $region25: #{tpu_custom_call.1} parent=23 // pred_check
          %p151 = pneg %p36
        $region26: #{tpu_custom_call.1} parent=23 // pred_check_branch
          %153 = sbr.rel (%p151) target = $region28
        $region27: #{tpu_custom_call.1} parent=23 // pred_region
          %s154 = sand.u32 %s26, 1
          %s155 = scalar_lea.sflag [#allocation5], %s154
          %s156 = sand.u32 %s26, 1
          %s157 = smul.addr %s156, 16
          %s158 = scalar_lea.vmem [#allocation4], %s157
          %s160 = ssub.s32 256, 256
          %161 = vsyncadd %s155, %s160
          %s162 = smul.addr %s16, 2
          %s163 = smul.addr %s162, 128
          %s164 = scalar_lea.hbm %s0, %s163
          %s166 = sshll.u32 %s158, 4
          %s167 = int_to_ptr.vmem [resolvable:$true] %s166
          %169 = dma.hbm_to_vmem [thread:$0]  %s164, 256, %s167, %s155
        $region28: #{tpu_custom_call.1} parent=23 // pred_fallthru
          _
      $region24: #{tpu_custom_call.1} parent=5 // pred_fallthru
        _
      %p170 = scmp.le.s32.totalorder 1, %s16
      %p171 = scmp.lt.s32.totalorder %s16, 3
      %p172 = pnand %p170, %p171
      %p173 = pneg %p172
      // Predicated region
      $region29: #{tpu_custom_call.1} parent=5 // pred_check
        _
      $region30: #{tpu_custom_call.1} parent=5 // pred_check_branch
        %175 = sbr.rel (%p172) target = $region32
      $region31: #{tpu_custom_call.1} parent=5 // pred_region
        %s176 = ssub.s32 %s16, 1
        %s177 = sand.u32 %s29, 1
        %s178 = scalar_lea.sflag [#allocation5], %s177
        %s179 = sand.u32 %s29, 1
        %s180 = smul.addr %s179, 16
        %s181 = scalar_lea.vmem [#allocation4], %s180
        // Predicated region
        $region33: #{tpu_custom_call.1} parent=31 // pred_check
          %p182 = pneg %p42
        $region34: #{tpu_custom_call.1} parent=31 // pred_check_branch
          %184 = sbr.rel (%p182) target = $region36
        $region35: #{tpu_custom_call.1} parent=31 // pred_region
          %185 = dma.done %s178, 256
        $region36: #{tpu_custom_call.1} parent=31 // pred_fallthru
          _
        // Predicated region
        $region37: #{tpu_custom_call.1} parent=31 // pred_check
          %p186 = pneg %p63
        $region38: #{tpu_custom_call.1} parent=31 // pred_check_branch
          %188 = sbr.rel (%p186) target = $region40
        $region39: #{tpu_custom_call.1} parent=31 // pred_region
          %189 = dma.done [#allocation8], 128
        $region40: #{tpu_custom_call.1} parent=31 // pred_fallthru
          _
        // Predicated region
        $region41: #{tpu_custom_call.1} parent=31 // pred_check
          %p190 = pneg %p84
        $region42: #{tpu_custom_call.1} parent=31 // pred_check_branch
          %192 = sbr.rel (%p190) target = $region44
        $region43: #{tpu_custom_call.1} parent=31 // pred_region
          %193 = dma.done [#allocation8], 128
        $region44: #{tpu_custom_call.1} parent=31 // pred_fallthru
          _
        %s194 = sand.u32 %s29, 1
        %s195 = scalar_lea.sflag [#allocation5], %s194
        %s196 = sand.u32 %s29, 1
        %s197 = smul.addr %s196, 16
        %s198 = scalar_lea.vmem [#allocation4], %s197
        %p199 = pneg %p42
        %p200 = pneg %p39
        %p201 = pneg %p63
        %p202 = pneg %p60
        %p203 = pneg %p84
        %p204 = pneg %p81
        %p205 = pneg %p110
        %p206 = pneg %p107
        %s207 = sand.u32 %s97, 1
        %s208 = scalar_lea.sflag [#allocation6], %s207
        %s209 = sand.u32 %s97, 1
        %s210 = smul.addr %s209, 8
        %s211 = scalar_lea.vmem [#allocation10], %s210
        %v212 = vlaneseq
        %v213 = vand.u32 %v212, 127
        %v214 = vadd.s32 %v213, 128
        %vm215 = vcmp.lt.s32.totalorder %v213, 0
        %v216 = vsub.s32 0, %v213
        %v217 = vsel %vm215, %v216, %v213
        %v218 = vshrl.u32 %v217, 4
        %v219 = vand.u32 %v217, 15
        %v220 = vsub.s32 0, %v219
        %v221 = vsel %vm215, %v220, %v219
        %vm222 = vcmp.lt.s32.totalorder %v214, 0
        %v223 = vsub.s32 0, %v214
        %v224 = vsel %vm222, %v223, %v214
        %v225 = vshrl.u32 %v224, 4
        %v226 = vand.u32 %v224, 15
        %v227 = vsub.s32 0, %v226
        %v228 = vsel %vm222, %v227, %v226
        %vm229 = vcmp.lt.s32.totalorder %v213, 16
        %vm230 = vcmp.lt.s32.totalorder %v214, 16
        %vm231 = vcmp.ge.s32.totalorder %v213, 240
        %vm232 = vcmp.ge.s32.totalorder %v214, 240
        %vm233 = vcmp.eq.s32.totalorder %v221, 0
        %vm234 = vcmp.eq.s32.totalorder %v228, 0
        %vm235 = vcmp.eq.s32.totalorder %v221, 15
        %vm236 = vcmp.eq.s32.totalorder %v228, 15
        %vm237 = vmand %vm229, %vm233
        %vm238 = vmand %vm230, %vm234
        %vm239 = vmand %vm229, %vm235
        %vm240 = vmand %vm230, %vm236
        %vm241 = vmand %vm231, %vm233
        %vm242 = vmand %vm232, %vm234
        %vm243 = vmand %vm231, %vm235
        %vm244 = vmand %vm232, %vm236
        %245 = vst [vmem:[#allocation2] sm:$0xff] 0.0
        %246 = vst [vmem:[#allocation2 + $0x18] sm:$0xff] 0.0
        %v247 = vld [vmem:[%s181] sm:$0xff]
        %v248 = vld [vmem:[%s181 + $0x8] sm:$0xff]
        %249 = vst [vmem:[#allocation2 + $0x8] sm:$0xff] %v247
        %250 = vst [vmem:[#allocation2 + $0x10] sm:$0xff] %v248
        %v251 = vld [vmem:[#allocation2] sm:$0xff]
        %v252 = vld [vmem:[#allocation2 + $0x8] sm:$0xff]
        %v253 = vld [vmem:[#allocation2 + $0x10] sm:$0xff]
        %v254 = vsel %vm233, 1, 0
        %v255 = vsel %vm234, 1, 0
        %vm256 = vcmp.eq.s32.totalorder %v254, 1
        %vm257 = vcmp.eq.s32.totalorder %v255, 1
        %261 = vrot.lane.b32.xlu0 %v251, 15
        %v262 = vpop.permute.xlu0 %261
        %263 = vrot.lane.b32.xlu0 %v252, 15
        %v264 = vpop.permute.xlu0 %263
        %265 = vrot.lane.b32.xlu0 %v253, 15
        %v266 = vpop.permute.xlu0 %265
        %vm267 = vcmask 121856
        %v268 = vsel %vm267, %v262, %v264
        %v269 = vsel %vm267, %v264, %v266
        %272 = vrot.lane.b32.xlu0 %v251, 17
        %v273 = vpop.permute.xlu0 %272
        %274 = vrot.lane.b32.xlu0 %v252, 17
        %v275 = vpop.permute.xlu0 %274
        %276 = vrot.lane.b32.xlu0 %v253, 17
        %v277 = vpop.permute.xlu0 %276
        %vm278 = vcmask 138240
        %v279 = vsel %vm278, %v273, %v275
        %v280 = vsel %vm278, %v275, %v277
        %v283 = vsel %vm256, %v268, %v279
        %v284 = vsel %vm257, %v269, %v280
        %v285 = vld [vmem:[#allocation2 + $0x8] sm:$0xff]
        %v286 = vld [vmem:[#allocation2 + $0x10] sm:$0xff]
        %v287 = vld [vmem:[#allocation2 + $0x18] sm:$0xff]
        %v288 = vsel %vm229, 1, 0
        %v289 = vsel %vm230, 1, 0
        %vm290 = vcmp.eq.s32.totalorder %v288, 1
        %vm291 = vcmp.eq.s32.totalorder %v289, 1
        %295 = vrot.lane.b32.xlu0 %v285, 113
        %v296 = vpop.permute.xlu0 %295
        %297 = vrot.lane.b32.xlu0 %v286, 113
        %v298 = vpop.permute.xlu0 %297
        %299 = vrot.lane.b32.xlu0 %v287, 113
        %v300 = vpop.permute.xlu0 %299
        %vm301 = vcmask 924672
        %v302 = vsel %vm301, %v296, %v298
        %v303 = vsel %vm301, %v298, %v300
        %v306 = vsel %vm290, %v302, %v283
        %v307 = vsel %vm291, %v303, %v284
        %v308 = vsel %vm237, 1, 0
        %v309 = vsel %vm238, 1, 0
        %vm310 = vcmp.eq.s32.totalorder %v308, 1
        %vm311 = vcmp.eq.s32.totalorder %v309, 1
        %312 = vrot.lane.b32.xlu0 %v285, 111
        %v313 = vpop.permute.xlu0 %312
        %314 = vrot.lane.b32.xlu0 %v286, 111
        %v315 = vpop.permute.xlu0 %314
        %316 = vrot.lane.b32.xlu0 %v287, 111
        %v317 = vpop.permute.xlu0 %316
        %vm318 = vcmask 908288
        %v319 = vsel %vm318, %v313, %v315
        %v320 = vsel %vm318, %v315, %v317
        %v323 = vsel %vm310, %v319, %v306
        %v324 = vsel %vm311, %v320, %v307
        %325 = vst [vmem:[#allocation3] sm:$0xff] %v323
        %326 = vst [vmem:[#allocation3 + $0x8] sm:$0xff] %v324
        %v327 = vld [vmem:[#allocation2] sm:$0xff]
        %v328 = vld [vmem:[#allocation2 + $0x8] sm:$0xff]
        %v329 = vld [vmem:[#allocation2 + $0x10] sm:$0xff]
        %v330 = vld [vmem:[#allocation2 + $0x8] sm:$0xff]
        %v331 = vld [vmem:[#allocation2 + $0x10] sm:$0xff]
        %v332 = vld [vmem:[#allocation2 + $0x18] sm:$0xff]
        %336 = vrot.lane.b32.xlu0 %v330, 112
        %v337 = vpop.permute.xlu0 %336
        %338 = vrot.lane.b32.xlu0 %v331, 112
        %v339 = vpop.permute.xlu0 %338
        %340 = vrot.lane.b32.xlu0 %v332, 112
        %v341 = vpop.permute.xlu0 %340
        %vm342 = vcmask 916480
        %v343 = vsel %vm342, %v337, %v339
        %v344 = vsel %vm342, %v339, %v341
        %350 = vrot.lane.b32.xlu0 %v327, 16
        %v351 = vpop.permute.xlu0 %350
        %352 = vrot.lane.b32.xlu0 %v328, 16
        %v353 = vpop.permute.xlu0 %352
        %354 = vrot.lane.b32.xlu0 %v329, 16
        %v355 = vpop.permute.xlu0 %354
        %vm356 = vcmask 130048
        %v357 = vsel %vm356, %v351, %v353
        %v358 = vsel %vm356, %v353, %v355
        %v361 = vsel %vm290, %v343, %v357
        %v362 = vsel %vm291, %v344, %v358
        %363 = vst [vmem:[#allocation3 + $0x10] sm:$0xff] %v361
        %364 = vst [vmem:[#allocation3 + $0x18] sm:$0xff] %v362
        %v365 = vld [vmem:[#allocation2] sm:$0xff]
        %v366 = vld [vmem:[#allocation2 + $0x8] sm:$0xff]
        %v367 = vld [vmem:[#allocation2 + $0x10] sm:$0xff]
        %v368 = vsel %vm235, 1, 0
        %v369 = vsel %vm236, 1, 0
        %vm370 = vcmp.eq.s32.totalorder %v368, 1
        %vm371 = vcmp.eq.s32.totalorder %v369, 1
        %375 = vrot.lane.b32.xlu0 %v365, 17
        %v376 = vpop.permute.xlu0 %375
        %377 = vrot.lane.b32.xlu0 %v366, 17
        %v378 = vpop.permute.xlu0 %377
        %379 = vrot.lane.b32.xlu0 %v367, 17
        %v380 = vpop.permute.xlu0 %379
        %v381 = vsel %vm278, %v376, %v378
        %v382 = vsel %vm278, %v378, %v380
        %385 = vrot.lane.b32.xlu0 %v365, 15
        %v386 = vpop.permute.xlu0 %385
        %387 = vrot.lane.b32.xlu0 %v366, 15
        %v388 = vpop.permute.xlu0 %387
        %389 = vrot.lane.b32.xlu0 %v367, 15
        %v390 = vpop.permute.xlu0 %389
        %v391 = vsel %vm267, %v386, %v388
        %v392 = vsel %vm267, %v388, %v390
        %v395 = vsel %vm370, %v381, %v391
        %v396 = vsel %vm371, %v382, %v392
        %v397 = vld [vmem:[#allocation2 + $0x8] sm:$0xff]
        %v398 = vld [vmem:[#allocation2 + $0x10] sm:$0xff]
        %v399 = vld [vmem:[#allocation2 + $0x18] sm:$0xff]
        %403 = vrot.lane.b32.xlu0 %v397, 111
        %v404 = vpop.permute.xlu0 %403
        %405 = vrot.lane.b32.xlu0 %v398, 111
        %v406 = vpop.permute.xlu0 %405
        %407 = vrot.lane.b32.xlu0 %v399, 111
        %v408 = vpop.permute.xlu0 %407
        %v409 = vsel %vm318, %v404, %v406
        %v410 = vsel %vm318, %v406, %v408
        %v413 = vsel %vm290, %v409, %v395
        %v414 = vsel %vm291, %v410, %v396
        %v415 = vsel %vm239, 1, 0
        %v416 = vsel %vm240, 1, 0
        %vm417 = vcmp.eq.s32.totalorder %v415, 1
        %vm418 = vcmp.eq.s32.totalorder %v416, 1
        %419 = vrot.lane.b32.xlu0 %v397, 113
        %v420 = vpop.permute.xlu0 %419
        %421 = vrot.lane.b32.xlu0 %v398, 113
        %v422 = vpop.permute.xlu0 %421
        %423 = vrot.lane.b32.xlu0 %v399, 113
        %v424 = vpop.permute.xlu0 %423
        %v425 = vsel %vm301, %v420, %v422
        %v426 = vsel %vm301, %v422, %v424
        %v429 = vsel %vm417, %v425, %v413
        %v430 = vsel %vm418, %v426, %v414
        %431 = vst [vmem:[#allocation3 + $0x20] sm:$0xff] %v429
        %432 = vst [vmem:[#allocation3 + $0x28] sm:$0xff] %v430
        %v433 = vld [vmem:[#allocation2] sm:$0xff]
        %v434 = vld [vmem:[#allocation2 + $0x8] sm:$0xff]
        %v435 = vld [vmem:[#allocation2 + $0x10] sm:$0xff]
        %v436 = vld [vmem:[#allocation2 + $0x8] sm:$0xff]
        %v437 = vld [vmem:[#allocation2 + $0x10] sm:$0xff]
        %v438 = vld [vmem:[#allocation2 + $0x18] sm:$0xff]
        %442 = vrot.lane.b32.xlu0 %v436, 127
        %v443 = vpop.permute.xlu0 %442
        %444 = vrot.lane.b32.xlu0 %v437, 127
        %v445 = vpop.permute.xlu0 %444
        %446 = vrot.lane.b32.xlu0 %v438, 127
        %v447 = vpop.permute.xlu0 %446
        %vm448 = vcmask 1039360
        %v449 = vsel %vm448, %v443, %v445
        %v450 = vsel %vm448, %v445, %v447
        %456 = vrot.lane.b32.xlu0 %v433, 1
        %v457 = vpop.permute.xlu0 %456
        %458 = vrot.lane.b32.xlu0 %v434, 1
        %v459 = vpop.permute.xlu0 %458
        %460 = vrot.lane.b32.xlu0 %v435, 1
        %v461 = vpop.permute.xlu0 %460
        %vm462 = vcmask 7168
        %v463 = vsel %vm462, %v457, %v459
        %v464 = vsel %vm462, %v459, %v461
        %v467 = vsel %vm256, %v449, %v463
        %v468 = vsel %vm257, %v450, %v464
        %469 = vst [vmem:[#allocation3 + $0x30] sm:$0xff] %v467
        %470 = vst [vmem:[#allocation3 + $0x38] sm:$0xff] %v468
        %v471 = vld [vmem:[#allocation2 + $0x8] sm:$0xff]
        %v472 = vld [vmem:[#allocation2 + $0x10] sm:$0xff]
        %473 = vst [vmem:[#allocation3 + $0x40] sm:$0xff] %v471
        %474 = vst [vmem:[#allocation3 + $0x48] sm:$0xff] %v472
        %v475 = vld [vmem:[#allocation2 + $0x8] sm:$0xff]
        %v476 = vld [vmem:[#allocation2 + $0x10] sm:$0xff]
        %v477 = vld [vmem:[#allocation2 + $0x18] sm:$0xff]
        %v478 = vld [vmem:[#allocation2] sm:$0xff]
        %v479 = vld [vmem:[#allocation2 + $0x8] sm:$0xff]
        %v480 = vld [vmem:[#allocation2 + $0x10] sm:$0xff]
        %484 = vrot.lane.b32.xlu0 %v478, 1
        %v485 = vpop.permute.xlu0 %484
        %486 = vrot.lane.b32.xlu0 %v479, 1
        %v487 = vpop.permute.xlu0 %486
        %488 = vrot.lane.b32.xlu0 %v480, 1
        %v489 = vpop.permute.xlu0 %488
        %v490 = vsel %vm462, %v485, %v487
        %v491 = vsel %vm462, %v487, %v489
        %497 = vrot.lane.b32.xlu0 %v475, 127
        %v498 = vpop.permute.xlu0 %497
        %499 = vrot.lane.b32.xlu0 %v476, 127
        %v500 = vpop.permute.xlu0 %499
        %501 = vrot.lane.b32.xlu0 %v477, 127
        %v502 = vpop.permute.xlu0 %501
        %v503 = vsel %vm448, %v498, %v500
        %v504 = vsel %vm448, %v500, %v502
        %v507 = vsel %vm370, %v490, %v503
        %v508 = vsel %vm371, %v491, %v504
        %509 = vst [vmem:[#allocation3 + $0x50] sm:$0xff] %v507
        %510 = vst [vmem:[#allocation3 + $0x58] sm:$0xff] %v508
        %v511 = vld [vmem:[#allocation2 + $0x8] sm:$0xff]
        %v512 = vld [vmem:[#allocation2 + $0x10] sm:$0xff]
        %v513 = vld [vmem:[#allocation2 + $0x18] sm:$0xff]
        %517 = vrot.lane.b32.xlu0 %v511, 111
        %v518 = vpop.permute.xlu0 %517
        %519 = vrot.lane.b32.xlu0 %v512, 111
        %v520 = vpop.permute.xlu0 %519
        %521 = vrot.lane.b32.xlu0 %v513, 111
        %v522 = vpop.permute.xlu0 %521
        %v523 = vsel %vm318, %v518, %v520
        %v524 = vsel %vm318, %v520, %v522
        %527 = vrot.lane.b32.xlu0 %v511, 113
        %v528 = vpop.permute.xlu0 %527
        %529 = vrot.lane.b32.xlu0 %v512, 113
        %v530 = vpop.permute.xlu0 %529
        %531 = vrot.lane.b32.xlu0 %v513, 113
        %v532 = vpop.permute.xlu0 %531
        %v533 = vsel %vm301, %v528, %v530
        %v534 = vsel %vm301, %v530, %v532
        %v537 = vsel %vm256, %v523, %v533
        %v538 = vsel %vm257, %v524, %v534
        %v539 = vld [vmem:[#allocation2] sm:$0xff]
        %v540 = vld [vmem:[#allocation2 + $0x8] sm:$0xff]
        %v541 = vld [vmem:[#allocation2 + $0x10] sm:$0xff]
        %v542 = vsel %vm231, 1, 0
        %v543 = vsel %vm232, 1, 0
        %vm544 = vcmp.eq.s32.totalorder %v542, 1
        %vm545 = vcmp.eq.s32.totalorder %v543, 1
        %549 = vrot.lane.b32.xlu0 %v539, 17
        %v550 = vpop.permute.xlu0 %549
        %551 = vrot.lane.b32.xlu0 %v540, 17
        %v552 = vpop.permute.xlu0 %551
        %553 = vrot.lane.b32.xlu0 %v541, 17
        %v554 = vpop.permute.xlu0 %553
        %v555 = vsel %vm278, %v550, %v552
        %v556 = vsel %vm278, %v552, %v554
        %v559 = vsel %vm544, %v555, %v537
        %v560 = vsel %vm545, %v556, %v538
        %v561 = vsel %vm241, 1, 0
        %v562 = vsel %vm242, 1, 0
        %vm563 = vcmp.eq.s32.totalorder %v561, 1
        %vm564 = vcmp.eq.s32.totalorder %v562, 1
        %565 = vrot.lane.b32.xlu0 %v539, 15
        %v566 = vpop.permute.xlu0 %565
        %567 = vrot.lane.b32.xlu0 %v540, 15
        %v568 = vpop.permute.xlu0 %567
        %569 = vrot.lane.b32.xlu0 %v541, 15
        %v570 = vpop.permute.xlu0 %569
        %v571 = vsel %vm267, %v566, %v568
        %v572 = vsel %vm267, %v568, %v570
        %v575 = vsel %vm563, %v571, %v559
        %v576 = vsel %vm564, %v572, %v560
        %577 = vst [vmem:[#allocation3 + $0x60] sm:$0xff] %v575
        %578 = vst [vmem:[#allocation3 + $0x68] sm:$0xff] %v576
        %v579 = vld [vmem:[#allocation2 + $0x8] sm:$0xff]
        %v580 = vld [vmem:[#allocation2 + $0x10] sm:$0xff]
        %v581 = vld [vmem:[#allocation2 + $0x18] sm:$0xff]
        %v582 = vld [vmem:[#allocation2] sm:$0xff]
        %v583 = vld [vmem:[#allocation2 + $0x8] sm:$0xff]
        %v584 = vld [vmem:[#allocation2 + $0x10] sm:$0xff]
        %588 = vrot.lane.b32.xlu0 %v582, 16
        %v589 = vpop.permute.xlu0 %588
        %590 = vrot.lane.b32.xlu0 %v583, 16
        %v591 = vpop.permute.xlu0 %590
        %592 = vrot.lane.b32.xlu0 %v584, 16
        %v593 = vpop.permute.xlu0 %592
        %v594 = vsel %vm356, %v589, %v591
        %v595 = vsel %vm356, %v591, %v593
        %601 = vrot.lane.b32.xlu0 %v579, 112
        %v602 = vpop.permute.xlu0 %601
        %603 = vrot.lane.b32.xlu0 %v580, 112
        %v604 = vpop.permute.xlu0 %603
        %605 = vrot.lane.b32.xlu0 %v581, 112
        %v606 = vpop.permute.xlu0 %605
        %v607 = vsel %vm342, %v602, %v604
        %v608 = vsel %vm342, %v604, %v606
        %v611 = vsel %vm544, %v594, %v607
        %v612 = vsel %vm545, %v595, %v608
        %613 = vst [vmem:[#allocation3 + $0x70] sm:$0xff] %v611
        %614 = vst [vmem:[#allocation3 + $0x78] sm:$0xff] %v612
        %v615 = vld [vmem:[#allocation2 + $0x8] sm:$0xff]
        %v616 = vld [vmem:[#allocation2 + $0x10] sm:$0xff]
        %v617 = vld [vmem:[#allocation2 + $0x18] sm:$0xff]
        %621 = vrot.lane.b32.xlu0 %v615, 113
        %v622 = vpop.permute.xlu0 %621
        %623 = vrot.lane.b32.xlu0 %v616, 113
        %v624 = vpop.permute.xlu0 %623
        %625 = vrot.lane.b32.xlu0 %v617, 113
        %v626 = vpop.permute.xlu0 %625
        %v627 = vsel %vm301, %v622, %v624
        %v628 = vsel %vm301, %v624, %v626
        %631 = vrot.lane.b32.xlu0 %v615, 111
        %v632 = vpop.permute.xlu0 %631
        %633 = vrot.lane.b32.xlu0 %v616, 111
        %v634 = vpop.permute.xlu0 %633
        %635 = vrot.lane.b32.xlu0 %v617, 111
        %v636 = vpop.permute.xlu0 %635
        %v637 = vsel %vm318, %v632, %v634
        %v638 = vsel %vm318, %v634, %v636
        %v641 = vsel %vm370, %v627, %v637
        %v642 = vsel %vm371, %v628, %v638
        %v643 = vld [vmem:[#allocation2] sm:$0xff]
        %v644 = vld [vmem:[#allocation2 + $0x8] sm:$0xff]
        %v645 = vld [vmem:[#allocation2 + $0x10] sm:$0xff]
        %649 = vrot.lane.b32.xlu0 %v643, 15
        %v650 = vpop.permute.xlu0 %649
        %651 = vrot.lane.b32.xlu0 %v644, 15
        %v652 = vpop.permute.xlu0 %651
        %653 = vrot.lane.b32.xlu0 %v645, 15
        %v654 = vpop.permute.xlu0 %653
        %v655 = vsel %vm267, %v650, %v652
        %v656 = vsel %vm267, %v652, %v654
        %v659 = vsel %vm544, %v655, %v641
        %v660 = vsel %vm545, %v656, %v642
        %v661 = vsel %vm243, 1, 0
        %v662 = vsel %vm244, 1, 0
        %vm663 = vcmp.eq.s32.totalorder %v661, 1
        %vm664 = vcmp.eq.s32.totalorder %v662, 1
        %665 = vrot.lane.b32.xlu0 %v643, 17
        %v666 = vpop.permute.xlu0 %665
        %667 = vrot.lane.b32.xlu0 %v644, 17
        %v668 = vpop.permute.xlu0 %667
        %669 = vrot.lane.b32.xlu0 %v645, 17
        %v670 = vpop.permute.xlu0 %669
        %v671 = vsel %vm278, %v666, %v668
        %v672 = vsel %vm278, %v668, %v670
        %v675 = vsel %vm663, %v671, %v659
        %v676 = vsel %vm664, %v672, %v660
        %677 = vst [vmem:[#allocation3 + $0x80] sm:$0xff] %v675
        %678 = vst [vmem:[#allocation3 + $0x88] sm:$0xff] %v676
        %v679 = vld [vmem:[#allocation7] sm:$0xff]
        %v680 = vld [vmem:[#allocation3] sm:$0xff]
        %v681 = vld [vmem:[#allocation3 + $0x8] sm:$0xff]
        %v682 = vld [vmem:[#allocation3 + $0x10] sm:$0xff]
        %v683 = vld [vmem:[#allocation3 + $0x18] sm:$0xff]
        %v684 = vld [vmem:[#allocation3 + $0x20] sm:$0xff]
        %v685 = vld [vmem:[#allocation3 + $0x28] sm:$0xff]
        %v686 = vld [vmem:[#allocation3 + $0x30] sm:$0xff]
        %v687 = vld [vmem:[#allocation3 + $0x38] sm:$0xff]
        %v688 = vld [vmem:[#allocation3 + $0x40] sm:$0xff]
        %v689 = vld [vmem:[#allocation3 + $0x48] sm:$0xff]
        %v690 = vld [vmem:[#allocation3 + $0x50] sm:$0xff]
        %v691 = vld [vmem:[#allocation3 + $0x58] sm:$0xff]
        %v692 = vld [vmem:[#allocation3 + $0x60] sm:$0xff]
        %v693 = vld [vmem:[#allocation3 + $0x68] sm:$0xff]
        %v694 = vld [vmem:[#allocation3 + $0x70] sm:$0xff]
        %v695 = vld [vmem:[#allocation3 + $0x78] sm:$0xff]
        %v696 = vld [vmem:[#allocation3 + $0x80] sm:$0xff]
        %v697 = vld [vmem:[#allocation3 + $0x88] sm:$0xff]
        %vm698 = vcmask 588800
        %v700 = vsel %vm698, %v679, 0
        %702 = vmatprep.subr.mxu0 %v681
        %703 = vmatpush1.msra.mxu0 %v680
        %704 = vmatprep.subr.mxu0 %v683
        %705 = vmatpush1.msra.mxu0 %v682
        %706 = vmatprep.subr.mxu0 %v685
        %707 = vmatpush1.msra.mxu0 %v684
        %708 = vmatprep.subr.mxu0 %v687
        %709 = vmatpush1.msra.mxu0 %v686
        %710 = vmatprep.subr.mxu0 %v689
        %711 = vmatpush1.msra.mxu0 %v688
        %712 = vmatprep.subr.mxu0 %v691
        %713 = vmatpush1.msra.mxu0 %v690
        %714 = vmatprep.subr.mxu0 %v693
        %715 = vmatpush1.msra.mxu0 %v692
        %716 = vmatprep.subr.mxu0 %v695
        %717 = vmatpush1.msra.mxu0 %v694
        %718 = vmatprep.subr.mxu0 %v697
        %719 = vmatpush1.msra.mxu0 %v696
        %720 = vmatprep.subr.mxu0 0.0
        %721 = vmatpush1.msra.mxu0 0.0
        %722 = vmatprep.subr.mxu0 0.0
        %723 = vmatpush1.msra.mxu0 0.0
        %724 = vmatprep.subr.mxu0 0.0
        %725 = vmatpush1.msra.mxu0 0.0
        %726 = vmatprep.subr.mxu0 0.0
        %727 = vmatpush1.msra.mxu0 0.0
        %728 = vmatprep.subr.mxu0 0.0
        %729 = vmatpush1.msra.mxu0 0.0
        %730 = vmatprep.subr.mxu0 0.0
        %731 = vmatpush1.msra.mxu0 0.0
        %732 = vmatprep.subr.mxu0 0.0
        %733 = vmatpush1.msra.mxu0 0.0
        %734 = vmatprep.subr.mxu0 0.0
        %735 = vmatpush1.msra.mxu0 0.0
        %736 = vmatprep.subr.mxu0 0.0
        %737 = vmatpush1.msra.mxu0 0.0
        %738 = vmatprep.subr.mxu0 0.0
        %739 = vmatpush1.msra.mxu0 0.0
        %740 = vmatprep.subr.mxu0 0.0
        %741 = vmatpush1.msra.mxu0 0.0
        %742 = vmatprep.subr.mxu0 0.0
        %743 = vmatpush1.msra.mxu0 0.0
        %744 = vmatprep.subr.mxu0 0.0
        %745 = vmatpush1.msra.mxu0 0.0
        %746 = vmatprep.subr.mxu0 0.0
        %747 = vmatpush1.msra.mxu0 0.0
        %748 = vmatprep.subr.mxu0 0.0
        %749 = vmatpush1.msra.mxu0 0.0
        %750 = vmatprep.subr.mxu0 0.0
        %751 = vmatpush1.msra.mxu0 0.0
        %752 = vmatprep.subr.mxu0 0.0
        %753 = vmatpush1.msra.mxu0 0.0
        %754 = vmatprep.subr.mxu0 0.0
        %755 = vmatpush1.msra.mxu0 0.0
        %756 = vmatprep.subr.mxu0 0.0
        %757 = vmatpush1.msra.mxu0 0.0
        %758 = vmatprep.subr.mxu0 0.0
        %759 = vmatpush1.msra.mxu0 0.0
        %760 = vmatprep.subr.mxu0 0.0
        %761 = vmatpush1.msra.mxu0 0.0
        %762 = vmatprep.subr.mxu0 0.0
        %763 = vmatpush1.msra.mxu0 0.0
        %764 = vmatprep.subr.mxu0 0.0
        %765 = vmatpush1.msra.mxu0 0.0
        %766 = vmatprep.mubr.f32.mxu0 0.0
        %767 = vmatmul.mubr.f32.gmra.mrb[0].mxu0 %v700
        %v768 = vpop.f32.mrb[0].mxu0
        %v769 = vadd.f32 0.0, %v768
        %v770 = vpop.f32.mrb[0].mxu0
        %v771 = vadd.f32 0.0, %v770
        %772 = vdwg.mxu0
        %v773 = vadd.f32 %v769, %v771
        %774 = vadd.xlane.f32.xlu0 %v773
        %v775 = vpop.xlane.xlu0 %774
        %v776 = vmul.f32 %v775, 0.00390625
        %v777 = vmul.f32 %v769, %v769
        %v778 = vmul.f32 %v771, %v771
        %v779 = vadd.f32 %v777, %v778
        %780 = vadd.xlane.f32.xlu0 %v779
        %v781 = vpop.xlane.xlu0 %780
        %v782 = vmul.f32 %v781, 0.00390625
        %v783 = vmul.f32 %v776, %v776
        %v784 = vsub.f32 %v782, %v783
        %v785 = vsub.f32 %v769, %v776
        %v786 = vsub.f32 %v771, %v776
        %v787 = vadd.f32 %v784, 1e-05
        %v788 = vrsqrt.pop %v787
        %v789 = vmul.f32 %v785, %v788
        %v790 = vmul.f32 %v786, %v788
        %v791 = vmax.f32 %v789, 0.0
        %v792 = vmax.f32 %v790, 0.0
        %793 = vst [vmem:[#allocation2 + $0x8] sm:$0xff] %v791
        %794 = vst [vmem:[#allocation2 + $0x10] sm:$0xff] %v792
        %v795 = vld [vmem:[#allocation2] sm:$0xff]
        %v796 = vld [vmem:[#allocation2 + $0x8] sm:$0xff]
        %v797 = vld [vmem:[#allocation2 + $0x10] sm:$0xff]
        %801 = vrot.lane.b32.xlu0 %v795, 15
        %v802 = vpop.permute.xlu0 %801
        %803 = vrot.lane.b32.xlu0 %v796, 15
        %v804 = vpop.permute.xlu0 %803
        %805 = vrot.lane.b32.xlu0 %v797, 15
        %v806 = vpop.permute.xlu0 %805
        %v807 = vsel %vm267, %v802, %v804
        %v808 = vsel %vm267, %v804, %v806
        %811 = vrot.lane.b32.xlu0 %v795, 17
        %v812 = vpop.permute.xlu0 %811
        %813 = vrot.lane.b32.xlu0 %v796, 17
        %v814 = vpop.permute.xlu0 %813
        %815 = vrot.lane.b32.xlu0 %v797, 17
        %v816 = vpop.permute.xlu0 %815
        %v817 = vsel %vm278, %v812, %v814
        %v818 = vsel %vm278, %v814, %v816
        %v821 = vsel %vm256, %v807, %v817
        %v822 = vsel %vm257, %v808, %v818
        %v823 = vld [vmem:[#allocation2 + $0x8] sm:$0xff]
        %v824 = vld [vmem:[#allocation2 + $0x10] sm:$0xff]
        %v825 = vld [vmem:[#allocation2 + $0x18] sm:$0xff]
        %829 = vrot.lane.b32.xlu0 %v823, 113
        %v830 = vpop.permute.xlu0 %829
        %831 = vrot.lane.b32.xlu0 %v824, 113
        %v832 = vpop.permute.xlu0 %831
        %833 = vrot.lane.b32.xlu0 %v825, 113
        %v834 = vpop.permute.xlu0 %833
        %v835 = vsel %vm301, %v830, %v832
        %v836 = vsel %vm301, %v832, %v834
        %v839 = vsel %vm290, %v835, %v821
        %v840 = vsel %vm291, %v836, %v822
        %841 = vrot.lane.b32.xlu0 %v823, 111
        %v842 = vpop.permute.xlu0 %841
        %843 = vrot.lane.b32.xlu0 %v824, 111
        %v844 = vpop.permute.xlu0 %843
        %845 = vrot.lane.b32.xlu0 %v825, 111
        %v846 = vpop.permute.xlu0 %845
        %v847 = vsel %vm318, %v842, %v844
        %v848 = vsel %vm318, %v844, %v846
        %v851 = vsel %vm310, %v847, %v839
        %v852 = vsel %vm311, %v848, %v840
        %853 = vst [vmem:[#allocation3] sm:$0xff] %v851
        %854 = vst [vmem:[#allocation3 + $0x8] sm:$0xff] %v852
        %v855 = vld [vmem:[#allocation2] sm:$0xff]
        %v856 = vld [vmem:[#allocation2 + $0x8] sm:$0xff]
        %v857 = vld [vmem:[#allocation2 + $0x10] sm:$0xff]
        %v858 = vld [vmem:[#allocation2 + $0x8] sm:$0xff]
        %v859 = vld [vmem:[#allocation2 + $0x10] sm:$0xff]
        %v860 = vld [vmem:[#allocation2 + $0x18] sm:$0xff]
        %864 = vrot.lane.b32.xlu0 %v858, 112
        %v865 = vpop.permute.xlu0 %864
        %866 = vrot.lane.b32.xlu0 %v859, 112
        %v867 = vpop.permute.xlu0 %866
        %868 = vrot.lane.b32.xlu0 %v860, 112
        %v869 = vpop.permute.xlu0 %868
        %v870 = vsel %vm342, %v865, %v867
        %v871 = vsel %vm342, %v867, %v869
        %877 = vrot.lane.b32.xlu0 %v855, 16
        %v878 = vpop.permute.xlu0 %877
        %879 = vrot.lane.b32.xlu0 %v856, 16
        %v880 = vpop.permute.xlu0 %879
        %881 = vrot.lane.b32.xlu0 %v857, 16
        %v882 = vpop.permute.xlu0 %881
        %v883 = vsel %vm356, %v878, %v880
        %v884 = vsel %vm356, %v880, %v882
        %v887 = vsel %vm290, %v870, %v883
        %v888 = vsel %vm291, %v871, %v884
        %889 = vst [vmem:[#allocation3 + $0x10] sm:$0xff] %v887
        %890 = vst [vmem:[#allocation3 + $0x18] sm:$0xff] %v888
        %v891 = vld [vmem:[#allocation2] sm:$0xff]
        %v892 = vld [vmem:[#allocation2 + $0x8] sm:$0xff]
        %v893 = vld [vmem:[#allocation2 + $0x10] sm:$0xff]
        %897 = vrot.lane.b32.xlu0 %v891, 17
        %v898 = vpop.permute.xlu0 %897
        %899 = vrot.lane.b32.xlu0 %v892, 17
        %v900 = vpop.permute.xlu0 %899
        %901 = vrot.lane.b32.xlu0 %v893, 17
        %v902 = vpop.permute.xlu0 %901
        %v903 = vsel %vm278, %v898, %v900
        %v904 = vsel %vm278, %v900, %v902
        %907 = vrot.lane.b32.xlu0 %v891, 15
        %v908 = vpop.permute.xlu0 %907
        %909 = vrot.lane.b32.xlu0 %v892, 15
        %v910 = vpop.permute.xlu0 %909
        %911 = vrot.lane.b32.xlu0 %v893, 15
        %v912 = vpop.permute.xlu0 %911
        %v913 = vsel %vm267, %v908, %v910
        %v914 = vsel %vm267, %v910, %v912
        %v917 = vsel %vm370, %v903, %v913
        %v918 = vsel %vm371, %v904, %v914
        %v919 = vld [vmem:[#allocation2 + $0x8] sm:$0xff]
        %v920 = vld [vmem:[#allocation2 + $0x10] sm:$0xff]
        %v921 = vld [vmem:[#allocation2 + $0x18] sm:$0xff]
        %925 = vrot.lane.b32.xlu0 %v919, 111
        %v926 = vpop.permute.xlu0 %925
        %927 = vrot.lane.b32.xlu0 %v920, 111
        %v928 = vpop.permute.xlu0 %927
        %929 = vrot.lane.b32.xlu0 %v921, 111
        %v930 = vpop.permute.xlu0 %929
        %v931 = vsel %vm318, %v926, %v928
        %v932 = vsel %vm318, %v928, %v930
        %v935 = vsel %vm290, %v931, %v917
        %v936 = vsel %vm291, %v932, %v918
        %937 = vrot.lane.b32.xlu0 %v919, 113
        %v938 = vpop.permute.xlu0 %937
        %939 = vrot.lane.b32.xlu0 %v920, 113
        %v940 = vpop.permute.xlu0 %939
        %941 = vrot.lane.b32.xlu0 %v921, 113
        %v942 = vpop.permute.xlu0 %941
        %v943 = vsel %vm301, %v938, %v940
        %v944 = vsel %vm301, %v940, %v942
        %v947 = vsel %vm417, %v943, %v935
        %v948 = vsel %vm418, %v944, %v936
        %949 = vst [vmem:[#allocation3 + $0x20] sm:$0xff] %v947
        %950 = vst [vmem:[#allocation3 + $0x28] sm:$0xff] %v948
        %v951 = vld [vmem:[#allocation2] sm:$0xff]
        %v952 = vld [vmem:[#allocation2 + $0x8] sm:$0xff]
        %v953 = vld [vmem:[#allocation2 + $0x10] sm:$0xff]
        %v954 = vld [vmem:[#allocation2 + $0x8] sm:$0xff]
        %v955 = vld [vmem:[#allocation2 + $0x10] sm:$0xff]
        %v956 = vld [vmem:[#allocation2 + $0x18] sm:$0xff]
        %960 = vrot.lane.b32.xlu0 %v954, 127
        %v961 = vpop.permute.xlu0 %960
        %962 = vrot.lane.b32.xlu0 %v955, 127
        %v963 = vpop.permute.xlu0 %962
        %964 = vrot.lane.b32.xlu0 %v956, 127
        %v965 = vpop.permute.xlu0 %964
        %v966 = vsel %vm448, %v961, %v963
        %v967 = vsel %vm448, %v963, %v965
        %973 = vrot.lane.b32.xlu0 %v951, 1
        %v974 = vpop.permute.xlu0 %973
        %975 = vrot.lane.b32.xlu0 %v952, 1
        %v976 = vpop.permute.xlu0 %975
        %977 = vrot.lane.b32.xlu0 %v953, 1
        %v978 = vpop.permute.xlu0 %977
        %v979 = vsel %vm462, %v974, %v976
        %v980 = vsel %vm462, %v976, %v978
        %v983 = vsel %vm256, %v966, %v979
        %v984 = vsel %vm257, %v967, %v980
        %985 = vst [vmem:[#allocation3 + $0x30] sm:$0xff] %v983
        %986 = vst [vmem:[#allocation3 + $0x38] sm:$0xff] %v984
        %v987 = vld [vmem:[#allocation2 + $0x8] sm:$0xff]
        %v988 = vld [vmem:[#allocation2 + $0x10] sm:$0xff]
        %989 = vst [vmem:[#allocation3 + $0x40] sm:$0xff] %v987
        %990 = vst [vmem:[#allocation3 + $0x48] sm:$0xff] %v988
        %v991 = vld [vmem:[#allocation2 + $0x8] sm:$0xff]
        %v992 = vld [vmem:[#allocation2 + $0x10] sm:$0xff]
        %v993 = vld [vmem:[#allocation2 + $0x18] sm:$0xff]
        %v994 = vld [vmem:[#allocation2] sm:$0xff]
        %v995 = vld [vmem:[#allocation2 + $0x8] sm:$0xff]
        %v996 = vld [vmem:[#allocation2 + $0x10] sm:$0xff]
        %1000 = vrot.lane.b32.xlu0 %v994, 1
        %v1001 = vpop.permute.xlu0 %1000
        %1002 = vrot.lane.b32.xlu0 %v995, 1
        %v1003 = vpop.permute.xlu0 %1002
        %1004 = vrot.lane.b32.xlu0 %v996, 1
        %v1005 = vpop.permute.xlu0 %1004
        %v1006 = vsel %vm462, %v1001, %v1003
        %v1007 = vsel %vm462, %v1003, %v1005
        %1013 = vrot.lane.b32.xlu0 %v991, 127
        %v1014 = vpop.permute.xlu0 %1013
        %1015 = vrot.lane.b32.xlu0 %v992, 127
        %v1016 = vpop.permute.xlu0 %1015
        %1017 = vrot.lane.b32.xlu0 %v993, 127
        %v1018 = vpop.permute.xlu0 %1017
        %v1019 = vsel %vm448, %v1014, %v1016
        %v1020 = vsel %vm448, %v1016, %v1018
        %v1023 = vsel %vm370, %v1006, %v1019
        %v1024 = vsel %vm371, %v1007, %v1020
        %1025 = vst [vmem:[#allocation3 + $0x50] sm:$0xff] %v1023
        %1026 = vst [vmem:[#allocation3 + $0x58] sm:$0xff] %v1024
        %v1027 = vld [vmem:[#allocation2 + $0x8] sm:$0xff]
        %v1028 = vld [vmem:[#allocation2 + $0x10] sm:$0xff]
        %v1029 = vld [vmem:[#allocation2 + $0x18] sm:$0xff]
        %1033 = vrot.lane.b32.xlu0 %v1027, 111
        %v1034 = vpop.permute.xlu0 %1033
        %1035 = vrot.lane.b32.xlu0 %v1028, 111
        %v1036 = vpop.permute.xlu0 %1035
        %1037 = vrot.lane.b32.xlu0 %v1029, 111
        %v1038 = vpop.permute.xlu0 %1037
        %v1039 = vsel %vm318, %v1034, %v1036
        %v1040 = vsel %vm318, %v1036, %v1038
        %1043 = vrot.lane.b32.xlu0 %v1027, 113
        %v1044 = vpop.permute.xlu0 %1043
        %1045 = vrot.lane.b32.xlu0 %v1028, 113
        %v1046 = vpop.permute.xlu0 %1045
        %1047 = vrot.lane.b32.xlu0 %v1029, 113
        %v1048 = vpop.permute.xlu0 %1047
        %v1049 = vsel %vm301, %v1044, %v1046
        %v1050 = vsel %vm301, %v1046, %v1048
        %v1053 = vsel %vm256, %v1039, %v1049
        %v1054 = vsel %vm257, %v1040, %v1050
        %v1055 = vld [vmem:[#allocation2] sm:$0xff]
        %v1056 = vld [vmem:[#allocation2 + $0x8] sm:$0xff]
        %v1057 = vld [vmem:[#allocation2 + $0x10] sm:$0xff]
        %1061 = vrot.lane.b32.xlu0 %v1055, 17
        %v1062 = vpop.permute.xlu0 %1061
        %1063 = vrot.lane.b32.xlu0 %v1056, 17
        %v1064 = vpop.permute.xlu0 %1063
        %1065 = vrot.lane.b32.xlu0 %v1057, 17
        %v1066 = vpop.permute.xlu0 %1065
        %v1067 = vsel %vm278, %v1062, %v1064
        %v1068 = vsel %vm278, %v1064, %v1066
        %v1071 = vsel %vm544, %v1067, %v1053
        %v1072 = vsel %vm545, %v1068, %v1054
        %1073 = vrot.lane.b32.xlu0 %v1055, 15
        %v1074 = vpop.permute.xlu0 %1073
        %1075 = vrot.lane.b32.xlu0 %v1056, 15
        %v1076 = vpop.permute.xlu0 %1075
        %1077 = vrot.lane.b32.xlu0 %v1057, 15
        %v1078 = vpop.permute.xlu0 %1077
        %v1079 = vsel %vm267, %v1074, %v1076
        %v1080 = vsel %vm267, %v1076, %v1078
        %v1083 = vsel %vm563, %v1079, %v1071
        %v1084 = vsel %vm564, %v1080, %v1072
        %1085 = vst [vmem:[#allocation3 + $0x60] sm:$0xff] %v1083
        %1086 = vst [vmem:[#allocation3 + $0x68] sm:$0xff] %v1084
        %v1087 = vld [vmem:[#allocation2 + $0x8] sm:$0xff]
        %v1088 = vld [vmem:[#allocation2 + $0x10] sm:$0xff]
        %v1089 = vld [vmem:[#allocation2 + $0x18] sm:$0xff]
        %v1090 = vld [vmem:[#allocation2] sm:$0xff]
        %v1091 = vld [vmem:[#allocation2 + $0x8] sm:$0xff]
        %v1092 = vld [vmem:[#allocation2 + $0x10] sm:$0xff]
        %1096 = vrot.lane.b32.xlu0 %v1090, 16
        %v1097 = vpop.permute.xlu0 %1096
        %1098 = vrot.lane.b32.xlu0 %v1091, 16
        %v1099 = vpop.permute.xlu0 %1098
        %1100 = vrot.lane.b32.xlu0 %v1092, 16
        %v1101 = vpop.permute.xlu0 %1100
        %v1102 = vsel %vm356, %v1097, %v1099
        %v1103 = vsel %vm356, %v1099, %v1101
        %1109 = vrot.lane.b32.xlu0 %v1087, 112
        %v1110 = vpop.permute.xlu0 %1109
        %1111 = vrot.lane.b32.xlu0 %v1088, 112
        %v1112 = vpop.permute.xlu0 %1111
        %1113 = vrot.lane.b32.xlu0 %v1089, 112
        %v1114 = vpop.permute.xlu0 %1113
        %v1115 = vsel %vm342, %v1110, %v1112
        %v1116 = vsel %vm342, %v1112, %v1114
        %v1119 = vsel %vm544, %v1102, %v1115
        %v1120 = vsel %vm545, %v1103, %v1116
        %1121 = vst [vmem:[#allocation3 + $0x70] sm:$0xff] %v1119
        %1122 = vst [vmem:[#allocation3 + $0x78] sm:$0xff] %v1120
        %v1123 = vld [vmem:[#allocation2 + $0x8] sm:$0xff]
        %v1124 = vld [vmem:[#allocation2 + $0x10] sm:$0xff]
        %v1125 = vld [vmem:[#allocation2 + $0x18] sm:$0xff]
        %1129 = vrot.lane.b32.xlu0 %v1123, 113
        %v1130 = vpop.permute.xlu0 %1129
        %1131 = vrot.lane.b32.xlu0 %v1124, 113
        %v1132 = vpop.permute.xlu0 %1131
        %1133 = vrot.lane.b32.xlu0 %v1125, 113
        %v1134 = vpop.permute.xlu0 %1133
        %v1135 = vsel %vm301, %v1130, %v1132
        %v1136 = vsel %vm301, %v1132, %v1134
        %1139 = vrot.lane.b32.xlu0 %v1123, 111
        %v1140 = vpop.permute.xlu0 %1139
        %1141 = vrot.lane.b32.xlu0 %v1124, 111
        %v1142 = vpop.permute.xlu0 %1141
        %1143 = vrot.lane.b32.xlu0 %v1125, 111
        %v1144 = vpop.permute.xlu0 %1143
        %v1145 = vsel %vm318, %v1140, %v1142
        %v1146 = vsel %vm318, %v1142, %v1144
        %v1149 = vsel %vm370, %v1135, %v1145
        %v1150 = vsel %vm371, %v1136, %v1146
        %v1151 = vld [vmem:[#allocation2] sm:$0xff]
        %v1152 = vld [vmem:[#allocation2 + $0x8] sm:$0xff]
        %v1153 = vld [vmem:[#allocation2 + $0x10] sm:$0xff]
        %1157 = vrot.lane.b32.xlu0 %v1151, 15
        %v1158 = vpop.permute.xlu0 %1157
        %1159 = vrot.lane.b32.xlu0 %v1152, 15
        %v1160 = vpop.permute.xlu0 %1159
        %1161 = vrot.lane.b32.xlu0 %v1153, 15
        %v1162 = vpop.permute.xlu0 %1161
        %v1163 = vsel %vm267, %v1158, %v1160
        %v1164 = vsel %vm267, %v1160, %v1162
        %v1167 = vsel %vm544, %v1163, %v1149
        %v1168 = vsel %vm545, %v1164, %v1150
        %1169 = vrot.lane.b32.xlu0 %v1151, 17
        %v1170 = vpop.permute.xlu0 %1169
        %1171 = vrot.lane.b32.xlu0 %v1152, 17
        %v1172 = vpop.permute.xlu0 %1171
        %1173 = vrot.lane.b32.xlu0 %v1153, 17
        %v1174 = vpop.permute.xlu0 %1173
        %v1175 = vsel %vm278, %v1170, %v1172
        %v1176 = vsel %vm278, %v1172, %v1174
        %v1179 = vsel %vm663, %v1175, %v1167
        %v1180 = vsel %vm664, %v1176, %v1168
        %1181 = vst [vmem:[#allocation3 + $0x80] sm:$0xff] %v1179
        %1182 = vst [vmem:[#allocation3 + $0x88] sm:$0xff] %v1180
        %v1183 = vld [vmem:[#allocation9] sm:$0xff]
        %v1184 = vld [vmem:[#allocation3] sm:$0xff]
        %v1185 = vld [vmem:[#allocation3 + $0x8] sm:$0xff]
        %v1186 = vld [vmem:[#allocation3 + $0x10] sm:$0xff]
        %v1187 = vld [vmem:[#allocation3 + $0x18] sm:$0xff]
        %v1188 = vld [vmem:[#allocation3 + $0x20] sm:$0xff]
        %v1189 = vld [vmem:[#allocation3 + $0x28] sm:$0xff]
        %v1190 = vld [vmem:[#allocation3 + $0x30] sm:$0xff]
        %v1191 = vld [vmem:[#allocation3 + $0x38] sm:$0xff]
        %v1192 = vld [vmem:[#allocation3 + $0x40] sm:$0xff]
        %v1193 = vld [vmem:[#allocation3 + $0x48] sm:$0xff]
        %v1194 = vld [vmem:[#allocation3 + $0x50] sm:$0xff]
        %v1195 = vld [vmem:[#allocation3 + $0x58] sm:$0xff]
        %v1196 = vld [vmem:[#allocation3 + $0x60] sm:$0xff]
        %v1197 = vld [vmem:[#allocation3 + $0x68] sm:$0xff]
        %v1198 = vld [vmem:[#allocation3 + $0x70] sm:$0xff]
        %v1199 = vld [vmem:[#allocation3 + $0x78] sm:$0xff]
        %v1200 = vld [vmem:[#allocation3 + $0x80] sm:$0xff]
        %v1201 = vld [vmem:[#allocation3 + $0x88] sm:$0xff]
        %v1203 = vsel %vm698, %v1183, 0
        %1205 = vmatprep.subr.mxu0 %v1185
        %1206 = vmatpush1.msra.mxu0 %v1184
        %1207 = vmatprep.subr.mxu0 %v1187
        %1208 = vmatpush1.msra.mxu0 %v1186
        %1209 = vmatprep.subr.mxu0 %v1189
        %1210 = vmatpush1.msra.mxu0 %v1188
        %1211 = vmatprep.subr.mxu0 %v1191
        %1212 = vmatpush1.msra.mxu0 %v1190
        %1213 = vmatprep.subr.mxu0 %v1193
        %1214 = vmatpush1.msra.mxu0 %v1192
        %1215 = vmatprep.subr.mxu0 %v1195
        %1216 = vmatpush1.msra.mxu0 %v1194
        %1217 = vmatprep.subr.mxu0 %v1197
        %1218 = vmatpush1.msra.mxu0 %v1196
        %1219 = vmatprep.subr.mxu0 %v1199
        %1220 = vmatpush1.msra.mxu0 %v1198
        %1221 = vmatprep.subr.mxu0 %v1201
        %1222 = vmatpush1.msra.mxu0 %v1200
        %1223 = vmatprep.subr.mxu0 0.0
        %1224 = vmatpush1.msra.mxu0 0.0
        %1225 = vmatprep.subr.mxu0 0.0
        %1226 = vmatpush1.msra.mxu0 0.0
        %1227 = vmatprep.subr.mxu0 0.0
        %1228 = vmatpush1.msra.mxu0 0.0
        %1229 = vmatprep.subr.mxu0 0.0
        %1230 = vmatpush1.msra.mxu0 0.0
        %1231 = vmatprep.subr.mxu0 0.0
        %1232 = vmatpush1.msra.mxu0 0.0
        %1233 = vmatprep.subr.mxu0 0.0
        %1234 = vmatpush1.msra.mxu0 0.0
        %1235 = vmatprep.subr.mxu0 0.0
        %1236 = vmatpush1.msra.mxu0 0.0
        %1237 = vmatprep.subr.mxu0 0.0
        %1238 = vmatpush1.msra.mxu0 0.0
        %1239 = vmatprep.subr.mxu0 0.0
        %1240 = vmatpush1.msra.mxu0 0.0
        %1241 = vmatprep.subr.mxu0 0.0
        %1242 = vmatpush1.msra.mxu0 0.0
        %1243 = vmatprep.subr.mxu0 0.0
        %1244 = vmatpush1.msra.mxu0 0.0
        %1245 = vmatprep.subr.mxu0 0.0
        %1246 = vmatpush1.msra.mxu0 0.0
        %1247 = vmatprep.subr.mxu0 0.0
        %1248 = vmatpush1.msra.mxu0 0.0
        %1249 = vmatprep.subr.mxu0 0.0
        %1250 = vmatpush1.msra.mxu0 0.0
        %1251 = vmatprep.subr.mxu0 0.0
        %1252 = vmatpush1.msra.mxu0 0.0
        %1253 = vmatprep.subr.mxu0 0.0
        %1254 = vmatpush1.msra.mxu0 0.0
        %1255 = vmatprep.subr.mxu0 0.0
        %1256 = vmatpush1.msra.mxu0 0.0
        %1257 = vmatprep.subr.mxu0 0.0
        %1258 = vmatpush1.msra.mxu0 0.0
        %1259 = vmatprep.subr.mxu0 0.0
        %1260 = vmatpush1.msra.mxu0 0.0
        %1261 = vmatprep.subr.mxu0 0.0
        %1262 = vmatpush1.msra.mxu0 0.0
        %1263 = vmatprep.subr.mxu0 0.0
        %1264 = vmatpush1.msra.mxu0 0.0
        %1265 = vmatprep.subr.mxu0 0.0
        %1266 = vmatpush1.msra.mxu0 0.0
        %1267 = vmatprep.subr.mxu0 0.0
        %1268 = vmatpush1.msra.mxu0 0.0
        %1269 = vmatprep.mubr.f32.mxu0 0.0
        %1270 = vmatmul.mubr.f32.gmra.mrb[0].mxu0 %v1203
        %v1271 = vpop.f32.mrb[0].mxu0
        %v1272 = vadd.f32 0.0, %v1271
        %v1273 = vpop.f32.mrb[0].mxu0
        %v1274 = vadd.f32 0.0, %v1273
        %1275 = vdwg.mxu0
        %v1276 = vadd.f32 %v1272, %v1274
        %1277 = vadd.xlane.f32.xlu0 %v1276
        %v1278 = vpop.xlane.xlu0 %1277
        %v1279 = vmul.f32 %v1278, 0.00390625
        %v1280 = vmul.f32 %v1272, %v1272
        %v1281 = vmul.f32 %v1274, %v1274
        %v1282 = vadd.f32 %v1280, %v1281
        %1283 = vadd.xlane.f32.xlu0 %v1282
        %v1284 = vpop.xlane.xlu0 %1283
        %v1285 = vmul.f32 %v1284, 0.00390625
        %v1286 = vmul.f32 %v1279, %v1279
        %v1287 = vsub.f32 %v1285, %v1286
        %v1288 = vsub.f32 %v1272, %v1279
        %v1289 = vsub.f32 %v1274, %v1279
        %v1290 = vadd.f32 %v1287, 1e-05
        %v1291 = vrsqrt.pop %v1290
        %v1292 = vmul.f32 %v1288, %v1291
        %v1293 = vmul.f32 %v1289, %v1291
        %v1294 = vld [vmem:[%s181] sm:$0xff]
        %v1295 = vld [vmem:[%s181 + $0x8] sm:$0xff]
        %v1296 = vadd.f32 %v1294, %v1292
        %v1297 = vadd.f32 %v1295, %v1293
        %v1300 = vcombine.low %v1296, %v1297
        %1302 = vst [vmem:[%s211] sm:$0xff] %v1300
        %s1303 = sand.u32 %s97, 1
        %s1304 = scalar_lea.sflag [#allocation6], %s1303
        %s1305 = sand.u32 %s97, 1
        %s1306 = smul.addr %s1305, 8
        %s1307 = scalar_lea.vmem [#allocation10], %s1306
        // Predicated region
        $region45: #{tpu_custom_call.1} parent=31 // pred_check
          %p1308 = pneg %p107
        $region46: #{tpu_custom_call.1} parent=31 // pred_check_branch
          %1310 = sbr.rel (%p1308) target = $region48
        $region47: #{tpu_custom_call.1} parent=31 // pred_region
          %s1312 = ssub.s32 128, 128
          %1313 = vsyncadd %s1304, %s1312
          %s1314 = smul.addr %s21, 2
          %s1315 = smul.addr %s1314, 64
          %s1316 = scalar_lea.hbm %s3, %s1315
          %s1318 = sshll.u32 %s1307, 4
          %s1319 = int_to_ptr.vmem [resolvable:$true] %s1318
          %1321 = dma.vmem_to_hbm [thread:$0]  %s1319, 128, %s1316, %s1304
        $region48: #{tpu_custom_call.1} parent=31 // pred_fallthru
          _
      $region32: #{tpu_custom_call.1} parent=5 // pred_fallthru
        _
      %p1322 = scmp.le.s32.totalorder 2, %s16
      // Predicated region
      $region49: #{tpu_custom_call.1} parent=5 // pred_check
        %p1323 = pneg %p1322
      $region50: #{tpu_custom_call.1} parent=5 // pred_check_branch
        %1325 = sbr.rel (%p1323) target = $region52
      $region51: #{tpu_custom_call.1} parent=5 // pred_region
        %s1326 = ssub.s32 %s16, 2
        // Predicated region
        $region53: #{tpu_custom_call.1} parent=51 // pred_check
          %p1327 = pneg %p113
        $region54: #{tpu_custom_call.1} parent=51 // pred_check_branch
          %1329 = sbr.rel (%p1327) target = $region56
        $region55: #{tpu_custom_call.1} parent=51 // pred_region
          %s1330 = sand.u32 %s98, 1
          %s1331 = scalar_lea.sflag [#allocation6], %s1330
          %s1332 = sand.u32 %s98, 1
          %s1333 = smul.addr %s1332, 8
          %s1334 = scalar_lea.vmem [#allocation10], %s1333
          %1335 = dma.done %s1331, 128
        $region56: #{tpu_custom_call.1} parent=51 // pred_fallthru
          _
      $region52: #{tpu_custom_call.1} parent=5 // pred_fallthru
        _
    $region6: #{tpu_custom_call.1} parent=1 // loop_footer
      %s20 = sadd.s32 1, %s16
    $region7: #{tpu_custom_call.1} parent=1 // loop_footer_branch
      %15 = sbr.rel target = $region3
    $region8: #{tpu_custom_call.1} parent=1 // loop_exit
      _
    %1336 = vsyncpa [#allocation5], 1
    %s1337 = scalar_lea.sflag [#allocation5], 1
    %1338 = vsyncpa %s1337, 1
    %1339 = vsyncpa [#allocation8], 1
    %1340 = vsyncpa [#allocation6], 1
    %s1341 = scalar_lea.sflag [#allocation6], 1
    %1342 = vsyncpa %s1341, 1

</llo_original>
